<compile_context>
chip_gen: v7x
topology: tpu7x:2x2x1
jax: 0.10.0
libtpu: 0.0.40
codegen_flags: <defaults>
</compile_context>

<pallas_src>
import functools

import jax
import jax.numpy as jnp
from jax.experimental import pallas as pl
from jax.experimental.pallas import tpu as pltpu


def _round_up(x, m):
    return ((x + m - 1) // m) * m


# ----------------------------- Pallas kernels -------------------------------

def _gcn_agg_kernel(a_ref, xw_ref, b_ref, wgt_ref, h_ref, g_ref):
    """One row tile of  H = relu(A_hat @ XW_all + b)  (K is a single block).

    Epilogue also emits the fc fold  g = Wg . H^T  (block-diagonal weight),
    written lane-dense as a (bs, tm) slab of the (bs, Np) output.
    """
    acc = jnp.dot(a_ref[...], xw_ref[...], preferred_element_type=jnp.float32)
    h = jnp.maximum(acc + b_ref[...], 0.0)                      # (tm, C)
    h_ref[...] = h.astype(h_ref.dtype)
    # g tile (bs, tm) = Wg (bs, C) . h^T  via transposed-RHS dot_general
    # (keeps the (bs, Np) output lane-dense; no explicit transpose).
    g_ref[...] = jax.lax.dot_general(
        wgt_ref[...], h,
        dimension_numbers=(((1,), (1,)), ((), ())),
        preferred_element_type=jnp.float32,
    ).astype(g_ref.dtype)


def gcn_agg(a_bf16, xw_all, b_all, wg_t, *, tm):
    """H_all = relu(A_hat @ XW_all + b);  g = per-batch fc fold of H_all.

    a_bf16 : (Np, Np) bf16  padded symmetric-normalized adjacency (built once)
    xw_all : (Np, C)  bf16  X @ W, batch folded into columns, C % 128 == 0
    b_all  : (1, C)   f32   conv bias tiled over batch (zero in pad columns)
    wg_t   : (bs, C)  f32   block-diagonal fc fold weight (zero in pad columns)
    """
    np_nodes = a_bf16.shape[0]
    c_pad = xw_all.shape[1]
    bs = wg_t.shape[0]
    assert np_nodes % tm == 0 and c_pad % 128 == 0

    # Explicit VMEM budget: 2x A tile (double buffered) + resident XW + small
    # operands + 2x H / g out tiles, +25% headroom.
    budget = 2 * (tm * np_nodes * 2             # A tiles (bf16)
                  + np_nodes * c_pad * 2        # XW slab (bf16)
                  + c_pad * 4 + bs * c_pad * 4  # bias + fold weight
                  + tm * c_pad * 4              # H out tiles
                  + bs * tm * 4)                # g out tiles
    vmem_limit = int(min(max(budget * 1.25 + (2 << 20), 32 << 20), 128 << 20))

    return pl.pallas_call(
        _gcn_agg_kernel,
        out_shape=(jax.ShapeDtypeStruct((np_nodes, c_pad), jnp.float32),
                   jax.ShapeDtypeStruct((bs, np_nodes), jnp.float32)),
        grid_spec=pltpu.PrefetchScalarGridSpec(
            num_scalar_prefetch=0,
            grid=(np_nodes // tm,),
            in_specs=[
                pl.BlockSpec((tm, np_nodes), lambda i: (i, 0)),     # A row tile
                pl.BlockSpec((np_nodes, c_pad), lambda i: (0, 0)),  # XW resident
                pl.BlockSpec((1, c_pad), lambda i: (0, 0)),         # bias
                pl.BlockSpec((bs, c_pad), lambda i: (0, 0)),        # fc fold wgt
            ],
            out_specs=[
                pl.BlockSpec((tm, c_pad), lambda i: (i, 0)),        # H row slab
                pl.BlockSpec((bs, tm), lambda i: (0, i)),           # g (N lanes)
            ],
        ),
        compiler_params=pltpu.CompilerParams(
            dimension_semantics=("parallel",),
            vmem_limit_bytes=vmem_limit),
        # TODO(synk): the dominant cost at real n_genes is streaming the
        #   >99%-zero dense bf16 A_hat once per layer; a block-sparse
        #   (row-tile, nonzero-col-tile) grid via PrefetchScalarGridSpec or a
        #   CSR gather with manual DMA would cut HBM traffic 10-100x and is the
        #   single largest remaining win.
    )(a_bf16, xw_all, b_all, wg_t)


def _head_kernel(g_ref, w1_ref, b1_ref, w2_ref, b2_ref, o_ref, acc_ref):
    """relu(lin1) -> lin2 -> log_softmax; lin1 K-tiled over the node dim."""
    k = pl.program_id(0)

    @pl.when(k == 0)
    def _():
        acc_ref[...] = jnp.zeros_like(acc_ref)

    acc_ref[...] += jnp.dot(g_ref[...], w1_ref[...],
                            preferred_element_type=jnp.float32)

    @pl.when(k == pl.num_programs(0) - 1)
    def _():
        h1 = jnp.maximum(acc_ref[...] + b1_ref[...], 0.0)
        logits = (jnp.dot(h1, w2_ref[...], preferred_element_type=jnp.float32)
                  + b2_ref[...])
        m = jnp.max(logits, axis=-1, keepdims=True)
        z = logits - m
        lse = jnp.log(jnp.sum(jnp.exp(z), axis=-1, keepdims=True))
        o_ref[...] = (z - lse).astype(o_ref.dtype)


def head(g, w1, b1, w2, b2, *, tk):
    """g : (bs, Np) padded node scores; w1 : (Np, hidden_fc) zero-padded rows."""
    bs, np_nodes = g.shape
    hfc = w1.shape[1]
    c = w2.shape[1]
    assert np_nodes % tk == 0
    return pl.pallas_call(
        _head_kernel,
        out_shape=jax.ShapeDtypeStruct((bs, c), jnp.float32),
        grid_spec=pltpu.PrefetchScalarGridSpec(
            num_scalar_prefetch=0,
            grid=(np_nodes // tk,),
            in_specs=[
                pl.BlockSpec((bs, tk), lambda k: (0, k)),
                pl.BlockSpec((tk, hfc), lambda k: (k, 0)),
                pl.BlockSpec((1, hfc), lambda k: (0, 0)),
                pl.BlockSpec((hfc, c), lambda k: (0, 0)),
                pl.BlockSpec((1, c), lambda k: (0, 0)),
            ],
            out_specs=pl.BlockSpec((bs, c), lambda k: (0, 0)),
            scratch_shapes=[pltpu.VMEM((bs, hfc), jnp.float32)],
        ),
        compiler_params=pltpu.CompilerParams(
            dimension_semantics=("arbitrary",)),
    )(g, w1, b1, w2, b2)


# ------------------------------ model glue -----------------------------------

def build_a_hat(edge_index, num_nodes):
    """Dense symmetric-normalized adjacency with self loops (GCNConv default).

    Note: duplicate edges accumulate weight >1 (matches .at[].add semantics);
    verify against the exact torch_geometric gcn_norm config used in training.
    """
    src, dst = edge_index[0], edge_index[1]
    a = jnp.zeros((num_nodes, num_nodes), jnp.float32)
    a = a.at[dst, src].add(1.0)            # messages flow src -> dst
    a = a + jnp.eye(num_nodes, dtype=jnp.float32)
    deg = jnp.sum(a, axis=1)
    dinv = jnp.where(deg > 0, 1.0 / jnp.sqrt(deg), 0.0)
    return dinv[:, None] * a * dinv[None, :]


def prepare_a_hat(a_hat, tm):
    """Pad A_hat to a multiple of the row tile and cast to bf16 ONCE."""
    assert tm % 128 == 0
    n = a_hat.shape[0]
    np_nodes = _round_up(n, tm)
    a = jnp.pad(a_hat, ((0, np_nodes - n), (0, np_nodes - n)))
    return a.astype(jnp.bfloat16)


def init_params(key, n_features, n_classes, num_layers, hidden_gcn, hidden_fc,
                n_genes, pembedding_dim):
    ks = jax.random.split(key, 16)

    def dense(k, fan_in, fan_out):
        scale = 1.0 / jnp.sqrt(jnp.float32(fan_in))
        return jax.random.uniform(k, (fan_in, fan_out), jnp.float32, -scale, scale)

    params = {}
    params["pe_w"] = dense(ks[0], n_genes, pembedding_dim)
    params["pe_b"] = jnp.zeros((1, pembedding_dim), jnp.float32)

    conv_w, conv_b = [], []
    in_dim = n_features + pembedding_dim
    for l in range(num_layers):
        conv_w.append(dense(ks[1 + l], in_dim, hidden_gcn))
        conv_b.append(jnp.zeros((1, hidden_gcn), jnp.float32))
        in_dim = hidden_gcn
    params["conv_w"], params["conv_b"] = conv_w, conv_b

    params["fc_w"] = dense(ks[8], num_layers * hidden_gcn, 1)
    params["fc_b"] = jnp.zeros((1, 1), jnp.float32)
    params["lin1_w"] = dense(ks[9], n_genes, hidden_fc)
    params["lin1_b"] = jnp.zeros((1, hidden_fc), jnp.float32)
    params["lin2_w"] = dense(ks[10], hidden_fc, n_classes)
    params["lin2_b"] = jnp.zeros((1, n_classes), jnp.float32)
    return params


def gcne_forward(params, x, a_bf16, *, num_layers, tm=512):
    """tm must be a multiple of 128 and divide a_bf16.shape[0].

    At real n_genes=15135, A pads to 15360 for tm in {512, 1024, ...}; use
    tm=512 on v7x (~15 MiB A tile, double-buffered within 64 MiB VMEM) and
    tm=1024-2048 on v6e/v5e (128 MiB VMEM).
    """
    hp = jax.lax.Precision.HIGHEST
    bs, n_nodes, _ = x.shape
    np_nodes = a_bf16.shape[0]
    hidden = params["conv_w"][0].shape[1]
    c_real = bs * hidden
    c_pad = _round_up(c_real, 128)     # lane-dense folded column dimension

    # pelayer(eye(n_genes)) == pe_w + pe_b : identity matmul deleted.
    pe = params["pe_w"] + params["pe_b"]                              # (N, P)
    x_in = jnp.concatenate(
        [x, jnp.broadcast_to(pe[None], (bs, n_nodes, pe.shape[1]))], axis=2)

    # fc weight reorganised for the per-layer fold:
    # torch.stack(xs,-1).view(...) puts feature index at  h*num_layers + l.
    fc_cols = params["fc_w"][:, 0].reshape(hidden, num_layers)        # (H, L)
    eye_bs = jnp.eye(bs, dtype=jnp.float32)

    g = jnp.zeros((bs, np_nodes), jnp.float32)
    h_prev = None                                                     # (N, bs, H)
    for l in range(num_layers):
        w = params["conv_w"][l]
        # X @ W hoisted out of the row-tile loop (tiny; column-batched layout).
        if l == 0:
            xw = jnp.einsum("bnf,fh->nbh", x_in, w, precision=hp)
        else:
            xw = jnp.einsum("nbh,hk->nbk", h_prev, w, precision=hp)
        xw_all = xw.reshape(n_nodes, c_real)
        xw_all = jnp.pad(xw_all,
                         ((0, np_nodes - n_nodes), (0, c_pad - c_real)))
        xw_all = xw_all.astype(jnp.bfloat16)                          # MXU input
        b_all = jnp.pad(jnp.tile(params["conv_b"][l], (1, bs)),
                        ((0, 0), (0, c_pad - c_real)))                # (1, C)
        wg_t = jnp.pad(jnp.kron(eye_bs, fc_cols[:, l][None, :]),
                       ((0, 0), (0, c_pad - c_real)))                 # (bs, C)

        h_pad, g_l = gcn_agg(a_bf16, xw_all, b_all, wg_t, tm=tm)
        h_prev = h_pad[:n_nodes, :c_real].reshape(n_nodes, bs, hidden)
        # Padded-node columns of g are killed by the zero-padded lin1 rows.
        g = g + g_l

    # fc bias folded into lin1 bias: (g + fc_b) @ W1 == g @ W1 + fc_b*colsum(W1).
    lin1_w_pad = jnp.pad(params["lin1_w"], ((0, np_nodes - n_nodes), (0, 0)))
    b1_eff = (params["lin1_b"]
              + params["fc_b"][0, 0]
              * jnp.sum(params["lin1_w"], axis=0, keepdims=True))

    # do_layers dropout + dropout before lin2 are identity in eval mode.
    return head(g, lin1_w_pad, b1_eff, params["lin2_w"], params["lin2_b"], tk=tm)


# pure-JAX reference (original stack/view/fc structure) for a sanity check.
# A_hat and X@W are rounded to bf16 to mirror the kernel's MXU inputs.
def gcne_reference(params, x, a_hat, num_layers):
    hp = jax.lax.Precision.HIGHEST
    bs, n, _ = x.shape
    a_bf = a_hat.astype(jnp.bfloat16).astype(jnp.float32)
    pe = params["pe_w"] + params["pe_b"]
    h = jnp.concatenate([x, jnp.broadcast_to(pe[None], (bs, n, pe.shape[1]))], 2)
    xs = []
    for l in range(num_layers):
        xw = jnp.einsum("bnf,fh->bnh", h, params["conv_w"][l], precision=hp)
        xw = xw.astype(jnp.bfloat16).astype(jnp.float32)
        h = jnp.maximum(
            jnp.einsum("nm,bmh->bnh", a_bf, xw, precision=hp)
            + params["conv_b"][l], 0.0)
        xs.append(h)
    xcat = jnp.stack(xs, axis=-1).reshape(bs, n, -1)
    g = (jnp.einsum("bnc,co->bno", xcat, params["fc_w"], precision=hp)
         + params["fc_b"]).reshape(bs, n)
    h1 = jnp.maximum(jnp.dot(g, params["lin1_w"], precision=hp)
                     + params["lin1_b"], 0.0)
    logits = jnp.dot(h1, params["lin2_w"], precision=hp) + params["lin2_b"]
    return jax.nn.log_softmax(logits, axis=-1)


if __name__ == "__main__":
    # Small, module-consistent shapes (n_genes == num_nodes by construction).
    bs = 2
    n_genes = 200          # stands in for 15135; exercises padding (200 -> 256)
    n_features = 4
    pembedding_dim = 8
    hidden_gcn = 16
    hidden_fc = 32
    n_classes = 3
    num_layers = 3
    n_edges = 512
    tm = 128               # small-shape demo tile; at real scale use 512 (v7x)
                           # or 1024-2048 (v6e/v5e) -> padded N stays 15360.

    key = jax.random.PRNGKey(0)
    k_x, k_e, k_p = jax.random.split(key, 3)

    x = jax.random.normal(k_x, (bs, n_genes, n_features), jnp.float32)
    edge_index = jax.random.randint(k_e, (2, n_edges), 0, n_genes, jnp.int32)
    a_hat = build_a_hat(edge_index, n_genes)
    a_bf16 = prepare_a_hat(a_hat, tm)            # padded + bf16, built once

    params = init_params(k_p, n_features, n_classes, num_layers, hidden_gcn,
                         hidden_fc, n_genes, pembedding_dim)

    fwd = jax.jit(functools.partial(gcne_forward, num_layers=num_layers, tm=tm))
    out = fwd(params, x, a_bf16)
    out = jax.block_until_ready(out)

    ref = gcne_reference(params, x, a_hat, num_layers)
    assert out.shape == (bs, n_classes)
    err = float(jnp.max(jnp.abs(out - ref)))
    assert err < 2e-3, f"mismatch vs pure-JAX reference: {err}"

    print("KERNEL_OK")
</pallas_src>

<mosaic_0001>
module attributes {stable_mosaic.version = 11 : i64} {
  func.func @_gcn_agg_kernel(%arg0: i32, %arg1: memref<128x256xbf16, #tpu.memory_space<vmem>>, %arg2: memref<256x128xbf16, #tpu.memory_space<vmem>>, %arg3: memref<1x128xf32, #tpu.memory_space<vmem>>, %arg4: memref<2x128xf32, #tpu.memory_space<vmem>>, %arg5: memref<128x128xf32, #tpu.memory_space<vmem>>, %arg6: memref<2x128xf32, #tpu.memory_space<vmem>>) attributes {dimension_semantics = [#tpu.dimension_semantics<parallel>], iteration_bounds = array<i64: 2>, scalar_prefetch = 0 : i64, scratch_operands = 0 : i64, tpu.core_type = #tpu.core_type<tc>, window_params = [{transform_indices = @transform_0, window_bounds = array<i64: 128, 256>}, {pipeline_mode = #tpu.pipeline_mode<synchronous>, transform_indices = @transform_1, window_bounds = array<i64: 256, 128>}, {pipeline_mode = #tpu.pipeline_mode<synchronous>, transform_indices = @transform_2, window_bounds = array<i64: 1, 128>}, {pipeline_mode = #tpu.pipeline_mode<synchronous>, transform_indices = @transform_3, window_bounds = array<i64: 2, 128>}, {transform_indices = @transform_4, window_bounds = array<i64: 128, 128>}, {transform_indices = @transform_5, window_bounds = array<i64: 2, 128>}]} {
    %c0 = arith.constant 0 : index
    %c0_0 = arith.constant 0 : index
    %0 = vector.load %arg1[%c0, %c0_0] : memref<128x256xbf16, #tpu.memory_space<vmem>>, vector<128x256xbf16>
    %c0_1 = arith.constant 0 : index
    %c0_2 = arith.constant 0 : index
    %1 = vector.load %arg2[%c0_1, %c0_2] : memref<256x128xbf16, #tpu.memory_space<vmem>>, vector<256x128xbf16>
    %cst = arith.constant dense<0.000000e+00> : vector<128x128xf32>
    %2 = tpu.matmul %0, %1, %cst {dimension_numbers = #tpu.dot_dimension_numbers<[1], [0], [0], [1], [0, 0, 1, 1], [], []>} : vector<128x256xbf16>, vector<256x128xbf16>, vector<128x128xf32> -> vector<128x128xf32>
    %c0_3 = arith.constant 0 : index
    %c0_4 = arith.constant 0 : index
    %3 = vector.load %arg3[%c0_3, %c0_4] : memref<1x128xf32, #tpu.memory_space<vmem>>, vector<1x128xf32>
    %4 = vector.broadcast %3 : vector<1x128xf32> to vector<128x128xf32>
    %5 = arith.addf %2, %4 : vector<128x128xf32>
    %cst_5 = arith.constant 0.000000e+00 : f32
    %6 = vector.broadcast %cst_5 : f32 to vector<128x128xf32>
    %7 = arith.maximumf %5, %6 : vector<128x128xf32>
    %c0_6 = arith.constant 0 : index
    %c0_7 = arith.constant 0 : index
    %8 = vector.load %arg5[%c0_6, %c0_7] : memref<128x128xf32, #tpu.memory_space<vmem>>, vector<128x128xf32>
    tpu.vector_store %arg5[%c0_6, %c0_7], %7 {strides = array<i32>} : memref<128x128xf32, #tpu.memory_space<vmem>>, vector<128x128xf32>,
    %c0_8 = arith.constant 0 : index
    %c0_9 = arith.constant 0 : index
    %9 = vector.load %arg4[%c0_8, %c0_9] : memref<2x128xf32, #tpu.memory_space<vmem>>, vector<2x128xf32>
    %cst_10 = arith.constant dense<0.000000e+00> : vector<2x128xf32>
    %10 = tpu.matmul %9, %7, %cst_10 {dimension_numbers = #tpu.dot_dimension_numbers<[1], [1], [0], [0], [0, 0, 1, 0], [], []>} : vector<2x128xf32>, vector<128x128xf32>, vector<2x128xf32> -> vector<2x128xf32>
    %c0_11 = arith.constant 0 : index
    %c0_12 = arith.constant 0 : index
    %11 = vector.load %arg6[%c0_11, %c0_12] : memref<2x128xf32, #tpu.memory_space<vmem>>, vector<2x128xf32>
    tpu.vector_store %arg6[%c0_11, %c0_12], %10 {strides = array<i32>} : memref<2x128xf32, #tpu.memory_space<vmem>>, vector<2x128xf32>,
    return
  }
  func.func @transform_0(%arg0: i32) -> (i32, i32) {
    %c0_i32 = arith.constant 0 : i32
    %c0_i32_0 = arith.constant 0 : i32
    return %arg0, %c0_i32 : i32, i32
  }
  func.func @transform_1(%arg0: i32) -> (i32, i32) {
    %c0_i32 = arith.constant 0 : i32
    %c0_i32_0 = arith.constant 0 : i32
    %c0_i32_1 = arith.constant 0 : i32
    return %c0_i32, %c0_i32_0 : i32, i32
  }
  func.func @transform_2(%arg0: i32) -> (i32, i32) {
    %c0_i32 = arith.constant 0 : i32
    %c0_i32_0 = arith.constant 0 : i32
    %c0_i32_1 = arith.constant 0 : i32
    return %c0_i32, %c0_i32_0 : i32, i32
  }
  func.func @transform_3(%arg0: i32) -> (i32, i32) {
    %c0_i32 = arith.constant 0 : i32
    %c0_i32_0 = arith.constant 0 : i32
    %c0_i32_1 = arith.constant 0 : i32
    return %c0_i32, %c0_i32_0 : i32, i32
  }
  func.func @transform_4(%arg0: i32) -> (i32, i32) {
    %c0_i32 = arith.constant 0 : i32
    %c0_i32_0 = arith.constant 0 : i32
    return %arg0, %c0_i32 : i32, i32
  }
  func.func @transform_5(%arg0: i32) -> (i32, i32) {
    %c0_i32 = arith.constant 0 : i32
    %c0_i32_0 = arith.constant 0 : i32
    return %c0_i32, %arg0 : i32, i32
  }
}

module attributes {stable_mosaic.version = 11 : i64} {
  func.func @_gcn_agg_kernel(%arg0: i32, %arg1: memref<128x256xbf16, #tpu.memory_space<vmem>>, %arg2: memref<256x128xbf16, #tpu.memory_space<vmem>>, %arg3: memref<1x128xf32, #tpu.memory_space<vmem>>, %arg4: memref<2x128xf32, #tpu.memory_space<vmem>>, %arg5: memref<128x128xf32, #tpu.memory_space<vmem>>, %arg6: memref<2x128xf32, #tpu.memory_space<vmem>>) attributes {dimension_semantics = [#tpu.dimension_semantics<parallel>], iteration_bounds = array<i64: 2>, scalar_prefetch = 0 : i64, scratch_operands = 0 : i64, tpu.core_type = #tpu.core_type<tc>, window_params = [{transform_indices = @transform_0, window_bounds = array<i64: 128, 256>}, {pipeline_mode = #tpu.pipeline_mode<synchronous>, transform_indices = @transform_1, window_bounds = array<i64: 256, 128>}, {pipeline_mode = #tpu.pipeline_mode<synchronous>, transform_indices = @transform_2, window_bounds = array<i64: 1, 128>}, {pipeline_mode = #tpu.pipeline_mode<synchronous>, transform_indices = @transform_3, window_bounds = array<i64: 2, 128>}, {transform_indices = @transform_4, window_bounds = array<i64: 128, 128>}, {transform_indices = @transform_5, window_bounds = array<i64: 2, 128>}]} {
    %c0 = arith.constant 0 : index
    %c0_0 = arith.constant 0 : index
    %0 = vector.load %arg1[%c0, %c0_0] : memref<128x256xbf16, #tpu.memory_space<vmem>>, vector<128x256xbf16>
    %c0_1 = arith.constant 0 : index
    %c0_2 = arith.constant 0 : index
    %1 = vector.load %arg2[%c0_1, %c0_2] : memref<256x128xbf16, #tpu.memory_space<vmem>>, vector<256x128xbf16>
    %cst = arith.constant dense<0.000000e+00> : vector<128x128xf32>
    %2 = tpu.matmul %0, %1, %cst {dimension_numbers = #tpu.dot_dimension_numbers<[1], [0], [0], [1], [0, 0, 1, 1], [], []>} : vector<128x256xbf16>, vector<256x128xbf16>, vector<128x128xf32> -> vector<128x128xf32>
    %c0_3 = arith.constant 0 : index
    %c0_4 = arith.constant 0 : index
    %3 = vector.load %arg3[%c0_3, %c0_4] : memref<1x128xf32, #tpu.memory_space<vmem>>, vector<1x128xf32>
    %4 = vector.broadcast %3 : vector<1x128xf32> to vector<128x128xf32>
    %5 = arith.addf %2, %4 : vector<128x128xf32>
    %cst_5 = arith.constant 0.000000e+00 : f32
    %6 = vector.broadcast %cst_5 : f32 to vector<128x128xf32>
    %7 = arith.maximumf %5, %6 : vector<128x128xf32>
    %c0_6 = arith.constant 0 : index
    %c0_7 = arith.constant 0 : index
    %8 = vector.load %arg5[%c0_6, %c0_7] : memref<128x128xf32, #tpu.memory_space<vmem>>, vector<128x128xf32>
    tpu.vector_store %arg5[%c0_6, %c0_7], %7 {strides = array<i32>} : memref<128x128xf32, #tpu.memory_space<vmem>>, vector<128x128xf32>,
    %c0_8 = arith.constant 0 : index
    %c0_9 = arith.constant 0 : index
    %9 = vector.load %arg4[%c0_8, %c0_9] : memref<2x128xf32, #tpu.memory_space<vmem>>, vector<2x128xf32>
    %cst_10 = arith.constant dense<0.000000e+00> : vector<2x128xf32>
    %10 = tpu.matmul %9, %7, %cst_10 {dimension_numbers = #tpu.dot_dimension_numbers<[1], [1], [0], [0], [0, 0, 1, 0], [], []>} : vector<2x128xf32>, vector<128x128xf32>, vector<2x128xf32> -> vector<2x128xf32>
    %c0_11 = arith.constant 0 : index
    %c0_12 = arith.constant 0 : index
    %11 = vector.load %arg6[%c0_11, %c0_12] : memref<2x128xf32, #tpu.memory_space<vmem>>, vector<2x128xf32>
    tpu.vector_store %arg6[%c0_11, %c0_12], %10 {strides = array<i32>} : memref<2x128xf32, #tpu.memory_space<vmem>>, vector<2x128xf32>,
    return
  }
  func.func @transform_0(%arg0: i32) -> (i32, i32) {
    %c0_i32 = arith.constant 0 : i32
    %c0_i32_0 = arith.constant 0 : i32
    return %arg0, %c0_i32 : i32, i32
  }
  func.func @transform_1(%arg0: i32) -> (i32, i32) {
    %c0_i32 = arith.constant 0 : i32
    %c0_i32_0 = arith.constant 0 : i32
    %c0_i32_1 = arith.constant 0 : i32
    return %c0_i32, %c0_i32_0 : i32, i32
  }
  func.func @transform_2(%arg0: i32) -> (i32, i32) {
    %c0_i32 = arith.constant 0 : i32
    %c0_i32_0 = arith.constant 0 : i32
    %c0_i32_1 = arith.constant 0 : i32
    return %c0_i32, %c0_i32_0 : i32, i32
  }
  func.func @transform_3(%arg0: i32) -> (i32, i32) {
    %c0_i32 = arith.constant 0 : i32
    %c0_i32_0 = arith.constant 0 : i32
    %c0_i32_1 = arith.constant 0 : i32
    return %c0_i32, %c0_i32_0 : i32, i32
  }
  func.func @transform_4(%arg0: i32) -> (i32, i32) {
    %c0_i32 = arith.constant 0 : i32
    %c0_i32_0 = arith.constant 0 : i32
    return %arg0, %c0_i32 : i32, i32
  }
  func.func @transform_5(%arg0: i32) -> (i32, i32) {
    %c0_i32 = arith.constant 0 : i32
    %c0_i32_0 = arith.constant 0 : i32
    return %c0_i32, %arg0 : i32, i32
  }
}

module attributes {stable_mosaic.version = 11 : i64} {
  func.func @_head_kernel(%arg0: i32, %arg1: memref<2x128xf32, #tpu.memory_space<vmem>>, %arg2: memref<128x32xf32, #tpu.memory_space<vmem>>, %arg3: memref<1x32xf32, #tpu.memory_space<vmem>>, %arg4: memref<32x3xf32, #tpu.memory_space<vmem>>, %arg5: memref<1x3xf32, #tpu.memory_space<vmem>>, %arg6: memref<2x3xf32, #tpu.memory_space<vmem>>, %arg7: memref<2x32xf32, #tpu.memory_space<vmem>>) attributes {dimension_semantics = [#tpu.dimension_semantics<arbitrary>], iteration_bounds = array<i64: 2>, scalar_prefetch = 0 : i64, scratch_operands = 1 : i64, tpu.core_type = #tpu.core_type<tc>, window_params = [{transform_indices = @transform_0, window_bounds = array<i64: 2, 128>}, {transform_indices = @transform_1, window_bounds = array<i64: 128, 32>}, {pipeline_mode = #tpu.pipeline_mode<synchronous>, transform_indices = @transform_2, window_bounds = array<i64: 1, 32>}, {pipeline_mode = #tpu.pipeline_mode<synchronous>, transform_indices = @transform_3, window_bounds = array<i64: 32, 3>}, {pipeline_mode = #tpu.pipeline_mode<synchronous>, transform_indices = @transform_4, window_bounds = array<i64: 1, 3>}, {pipeline_mode = #tpu.pipeline_mode<synchronous>, transform_indices = @transform_5, window_bounds = array<i64: 2, 3>}]} {
    %c0_i32 = arith.constant 0 : i32
    %0 = arith.cmpi eq, %arg0, %c0_i32 : i32
    %1 = arith.extui %0 : i1 to i32
    %c0_i32_0 = arith.constant 0 : i32
    %2 = arith.cmpi ne, %1, %c0_i32_0 : i32
    scf.if %2 {
      %cst_9 = arith.constant 0.000000e+00 : f32
      %12 = vector.broadcast %cst_9 : f32 to vector<2x32xf32>
      %c0_10 = arith.constant 0 : index
      %c0_11 = arith.constant 0 : index
      %13 = vector.load %arg7[%c0_10, %c0_11] : memref<2x32xf32, #tpu.memory_space<vmem>>, vector<2x32xf32>
      tpu.vector_store %arg7[%c0_10, %c0_11], %12 {strides = array<i32>} : memref<2x32xf32, #tpu.memory_space<vmem>>, vector<2x32xf32>,
    } else {
    }
    %c0 = arith.constant 0 : index
    %c0_1 = arith.constant 0 : index
    %3 = vector.load %arg7[%c0, %c0_1] : memref<2x32xf32, #tpu.memory_space<vmem>>, vector<2x32xf32>
    %c0_2 = arith.constant 0 : index
    %c0_3 = arith.constant 0 : index
    %4 = vector.load %arg1[%c0_2, %c0_3] : memref<2x128xf32, #tpu.memory_space<vmem>>, vector<2x128xf32>
    %c0_4 = arith.constant 0 : index
    %c0_5 = arith.constant 0 : index
    %5 = vector.load %arg2[%c0_4, %c0_5] : memref<128x32xf32, #tpu.memory_space<vmem>>, vector<128x32xf32>
    %cst = arith.constant dense<0.000000e+00> : vector<2x32xf32>
    %6 = tpu.matmul %4, %5, %cst {dimension_numbers = #tpu.dot_dimension_numbers<[1], [0], [0], [1], [0, 0, 1, 1], [], []>} : vector<2x128xf32>, vector<128x32xf32>, vector<2x32xf32> -> vector<2x32xf32>
    %7 = arith.addf %3, %6 : vector<2x32xf32>
    %c0_6 = arith.constant 0 : index
    %c0_7 = arith.constant 0 : index
    %8 = vector.load %arg7[%c0_6, %c0_7] : memref<2x32xf32, #tpu.memory_space<vmem>>, vector<2x32xf32>
    tpu.vector_store %arg7[%c0_6, %c0_7], %7 {strides = array<i32>} : memref<2x32xf32, #tpu.memory_space<vmem>>, vector<2x32xf32>,
    %c1_i32 = arith.constant 1 : i32
    %9 = arith.cmpi eq, %arg0, %c1_i32 : i32
    %10 = arith.extui %9 : i1 to i32
    %c0_i32_8 = arith.constant 0 : i32
    %11 = arith.cmpi ne, %10, %c0_i32_8 : i32
    scf.if %11 {
      %c0_9 = arith.constant 0 : index
      %c0_10 = arith.constant 0 : index
      %12 = vector.load %arg7[%c0_9, %c0_10] : memref<2x32xf32, #tpu.memory_space<vmem>>, vector<2x32xf32>
      %c0_11 = arith.constant 0 : index
      %c0_12 = arith.constant 0 : index
      %13 = vector.load %arg3[%c0_11, %c0_12] : memref<1x32xf32, #tpu.memory_space<vmem>>, vector<1x32xf32>
      %14 = vector.broadcast %13 : vector<1x32xf32> to vector<2x32xf32>
      %15 = arith.addf %12, %14 : vector<2x32xf32>
      %cst_13 = arith.constant 0.000000e+00 : f32
      %16 = vector.broadcast %cst_13 : f32 to vector<2x32xf32>
      %17 = arith.maximumf %15, %16 : vector<2x32xf32>
      %c0_14 = arith.constant 0 : index
      %c0_15 = arith.constant 0 : index
      %18 = vector.load %arg4[%c0_14, %c0_15] : memref<32x3xf32, #tpu.memory_space<vmem>>, vector<32x3xf32>
      %cst_16 = arith.constant dense<0.000000e+00> : vector<2x3xf32>
      %19 = tpu.matmul %17, %18, %cst_16 {dimension_numbers = #tpu.dot_dimension_numbers<[1], [0], [0], [1], [0, 0, 1, 1], [], []>} : vector<2x32xf32>, vector<32x3xf32>, vector<2x3xf32> -> vector<2x3xf32>
      %c0_17 = arith.constant 0 : index
      %c0_18 = arith.constant 0 : index
      %20 = vector.load %arg5[%c0_17, %c0_18] : memref<1x3xf32, #tpu.memory_space<vmem>>, vector<1x3xf32>
      %21 = vector.broadcast %20 : vector<1x3xf32> to vector<2x3xf32>
      %22 = arith.addf %19, %21 : vector<2x3xf32>
      %cst_19 = arith.constant dense<0xFF800000> : vector<2xf32>
      %23 = vector.multi_reduction <maximumf>, %22, %cst_19 [1] : vector<2x3xf32> to vector<2xf32>
      %24 = vector.shape_cast %23 : vector<2xf32> to vector<2x1xf32>
      %25 = vector.broadcast %24 : vector<2x1xf32> to vector<2x3xf32>
      %26 = arith.subf %22, %25 : vector<2x3xf32>
      %27 = math.exp %26 : vector<2x3xf32>
      %cst_20 = arith.constant dense<0.000000e+00> : vector<2xf32>
      %28 = vector.multi_reduction <add>, %27, %cst_20 [1] : vector<2x3xf32> to vector<2xf32>
      %29 = vector.shape_cast %28 : vector<2xf32> to vector<2x1xf32>
      %30 = math.log %29 : vector<2x1xf32>
      %31 = vector.broadcast %30 : vector<2x1xf32> to vector<2x3xf32>
      %32 = arith.subf %26, %31 : vector<2x3xf32>
      %c0_21 = arith.constant 0 : index
      %c0_22 = arith.constant 0 : index
      %33 = vector.load %arg6[%c0_21, %c0_22] : memref<2x3xf32, #tpu.memory_space<vmem>>, vector<2x3xf32>
      tpu.vector_store %arg6[%c0_21, %c0_22], %32 {strides = array<i32>} : memref<2x3xf32, #tpu.memory_space<vmem>>, vector<2x3xf32>,
    } else {
    }
    return
  }
  func.func @transform_0(%arg0: i32) -> (i32, i32) {
    %c0_i32 = arith.constant 0 : i32
    %c0_i32_0 = arith.constant 0 : i32
    return %c0_i32, %arg0 : i32, i32
  }
  func.func @transform_1(%arg0: i32) -> (i32, i32) {
    %c0_i32 = arith.constant 0 : i32
    %c0_i32_0 = arith.constant 0 : i32
    return %arg0, %c0_i32 : i32, i32
  }
  func.func @transform_2(%arg0: i32) -> (i32, i32) {
    %c0_i32 = arith.constant 0 : i32
    %c0_i32_0 = arith.constant 0 : i32
    %c0_i32_1 = arith.constant 0 : i32
    return %c0_i32, %c0_i32_0 : i32, i32
  }
  func.func @transform_3(%arg0: i32) -> (i32, i32) {
    %c0_i32 = arith.constant 0 : i32
    %c0_i32_0 = arith.constant 0 : i32
    %c0_i32_1 = arith.constant 0 : i32
    return %c0_i32, %c0_i32_0 : i32, i32
  }
  func.func @transform_4(%arg0: i32) -> (i32, i32) {
    %c0_i32 = arith.constant 0 : i32
    %c0_i32_0 = arith.constant 0 : i32
    %c0_i32_1 = arith.constant 0 : i32
    return %c0_i32, %c0_i32_0 : i32, i32
  }
  func.func @transform_5(%arg0: i32) -> (i32, i32) {
    %c0_i32 = arith.constant 0 : i32
    %c0_i32_0 = arith.constant 0 : i32
    %c0_i32_1 = arith.constant 0 : i32
    return %c0_i32, %c0_i32_0 : i32, i32
  }
}

</mosaic_0001>

<llo_original>
// kernel: squeeze.5
$region0: #{squeeze.5}
  %s0 = inlined_call_operand.vmem [shape: f32[48], index: 0, kind: input, shape index: {}]
  %s1 = inlined_call_operand.vmem [shape: f32[16,3], index: 1, kind: output, shape index: {}]
  $region1: #{squeeze.5} parent=0
    #allocation0 [shape = 'u8[4096]{0}', space=vmem, size = 0x1000, scoped, tag = 'scoped mem for input reshape']
    %s3 = sshllo.u32 0, 1
    %v4 = vld [vmem:[%s0] sm:%s3]
    %5 = vst [vmem:[#allocation0] sm:%s3] %v4
    %v6 = vld [vmem:[#allocation0] sm:$0x1]
    %vm7 = vcmask 23552
    %8 = vst.msk [vmem:[%s1] sm:$0x1] %vm7, %v6
    %v9 = vld [vmem:[#allocation0] sm:$0x1]
    %10 = vrot.lane.b32.xlu0 %v9, 125
    %v11 = vpop.permute.xlu0 %10
    %vm12 = vcmask 23552
    %s13 = scalar_lea.vmem %s1, 1
    %14 = vst.msk [vmem:[%s13] sm:$0x1] %vm12, %v11
    %v15 = vld [vmem:[#allocation0] sm:$0x1]
    %16 = vrot.lane.b32.xlu0 %v15, 122
    %v17 = vpop.permute.xlu0 %16
    %vm18 = vcmask 23552
    %s19 = scalar_lea.vmem %s1, 2
    %20 = vst.msk [vmem:[%s19] sm:$0x1] %vm18, %v17
    %v21 = vld [vmem:[#allocation0] sm:$0x1]
    %22 = vrot.lane.b32.xlu0 %v21, 119
    %v23 = vpop.permute.xlu0 %22
    %vm24 = vcmask 23552
    %s25 = scalar_lea.vmem %s1, 3
    %26 = vst.msk [vmem:[%s25] sm:$0x1] %vm24, %v23
    %v27 = vld [vmem:[#allocation0] sm:$0x1]
    %28 = vrot.lane.b32.xlu0 %v27, 116
    %v29 = vpop.permute.xlu0 %28
    %vm30 = vcmask 23552
    %s31 = scalar_lea.vmem %s1, 4
    %32 = vst.msk [vmem:[%s31] sm:$0x1] %vm30, %v29
    %v33 = vld [vmem:[#allocation0] sm:$0x1]
    %34 = vrot.lane.b32.xlu0 %v33, 113
    %v35 = vpop.permute.xlu0 %34
    %vm36 = vcmask 23552
    %s37 = scalar_lea.vmem %s1, 5
    %38 = vst.msk [vmem:[%s37] sm:$0x1] %vm36, %v35
    %v39 = vld [vmem:[#allocation0] sm:$0x1]
    %40 = vrot.lane.b32.xlu0 %v39, 110
    %v41 = vpop.permute.xlu0 %40
    %vm42 = vcmask 23552
    %s43 = scalar_lea.vmem %s1, 6
    %44 = vst.msk [vmem:[%s43] sm:$0x1] %vm42, %v41
    %v45 = vld [vmem:[#allocation0] sm:$0x1]
    %46 = vrot.lane.b32.xlu0 %v45, 107
    %v47 = vpop.permute.xlu0 %46
    %vm48 = vcmask 23552
    %s49 = scalar_lea.vmem %s1, 7
    %50 = vst.msk [vmem:[%s49] sm:$0x1] %vm48, %v47
    %v51 = vld [vmem:[#allocation0] sm:$0x1]
    %52 = vrot.lane.b32.xlu0 %v51, 104
    %v53 = vpop.permute.xlu0 %52
    %vm54 = vcmask 23552
    %s55 = scalar_lea.vmem %s1, 8
    %56 = vst.msk [vmem:[%s55] sm:$0x1] %vm54, %v53
    %v57 = vld [vmem:[#allocation0] sm:$0x1]
    %58 = vrot.lane.b32.xlu0 %v57, 101
    %v59 = vpop.permute.xlu0 %58
    %vm60 = vcmask 23552
    %s61 = scalar_lea.vmem %s1, 9
    %62 = vst.msk [vmem:[%s61] sm:$0x1] %vm60, %v59
    %v63 = vld [vmem:[#allocation0] sm:$0x1]
    %64 = vrot.lane.b32.xlu0 %v63, 98
    %v65 = vpop.permute.xlu0 %64
    %vm66 = vcmask 23552
    %s67 = scalar_lea.vmem %s1, 10
    %68 = vst.msk [vmem:[%s67] sm:$0x1] %vm66, %v65
    %v69 = vld [vmem:[#allocation0] sm:$0x1]
    %70 = vrot.lane.b32.xlu0 %v69, 95
    %v71 = vpop.permute.xlu0 %70
    %vm72 = vcmask 23552
    %s73 = scalar_lea.vmem %s1, 11
    %74 = vst.msk [vmem:[%s73] sm:$0x1] %vm72, %v71
    %v75 = vld [vmem:[#allocation0] sm:$0x1]
    %76 = vrot.lane.b32.xlu0 %v75, 92
    %v77 = vpop.permute.xlu0 %76
    %vm78 = vcmask 23552
    %s79 = scalar_lea.vmem %s1, 12
    %80 = vst.msk [vmem:[%s79] sm:$0x1] %vm78, %v77
    %v81 = vld [vmem:[#allocation0] sm:$0x1]
    %82 = vrot.lane.b32.xlu0 %v81, 89
    %v83 = vpop.permute.xlu0 %82
    %vm84 = vcmask 23552
    %s85 = scalar_lea.vmem %s1, 13
    %86 = vst.msk [vmem:[%s85] sm:$0x1] %vm84, %v83
    %v87 = vld [vmem:[#allocation0] sm:$0x1]
    %88 = vrot.lane.b32.xlu0 %v87, 86
    %v89 = vpop.permute.xlu0 %88
    %vm90 = vcmask 23552
    %s91 = scalar_lea.vmem %s1, 14
    %92 = vst.msk [vmem:[%s91] sm:$0x1] %vm90, %v89
    %v93 = vld [vmem:[#allocation0] sm:$0x1]
    %94 = vrot.lane.b32.xlu0 %v93, 83
    %v95 = vpop.permute.xlu0 %94
    %vm96 = vcmask 23552
    %s97 = scalar_lea.vmem %s1, 15
    %98 = vst.msk [vmem:[%s97] sm:$0x1] %vm96, %v95

// kernel: gcne_forward.4
$region0: #{gcne_forward.4}
  #allocation0 [shape = 'u32[]', space=smem, size = 0x4, offset = 0x4, fixed_abs, tag = 'smem constant byte address 0x4 - core index']
  #allocation1 [shape = 'u32[144,128]{1,0:T(1,128)}', space=vmem, size = 0x12000, scoped, tag = 'internal scratch']
  %s0 = inlined_call_operand.vmem [shape: bf16[256,256], index: 0, kind: input, shape index: {}]
  %s1 = inlined_call_operand.vmem [shape: bf16[256,128], index: 1, kind: input, shape index: {}]
  %s2 = inlined_call_operand.vmem [shape: f32[1,128], index: 2, kind: input, shape index: {}]
  %s3 = inlined_call_operand.vmem [shape: f32[2,128], index: 3, kind: input, shape index: {}]
  %s4 = inlined_call_operand.vmem [shape: f32[256,128], index: 4, kind: output, shape index: {0}]
  %s5 = inlined_call_operand.vmem [shape: f32[2,256], index: 5, kind: output, shape index: {1}]
  %6 = xla_tuple %s4, %s5
  %s7 = sld [smem:[#allocation0]]
  $region57: #{gcne_forward.4} parent=0
    _
  %s9 = ssub.s32 1, %s7
  %s10 = scalar_select 0, %s9, %s7
  loop: start=0, step=1, limit=4
  $region2: #{gcne_forward.4} parent=0 // loop_pre_header
    _
  $region3: #{gcne_forward.4} parent=0 // loop_header
    %s12 = sphi 0, %s16
    %p13 = scmp.ge.s32.totalorder %s12, 4
    %s22 = sphi 0, %s24
    %s25 = sphi 0, %s22
    %s26 = sphi 0, %s25
    %s42 = sphi 0, %s26
    %s46 = sphi 0, %s46
    %s48 = sphi 0, %s46
    %s49 = sphi 0, %s48
    %s63 = sphi 0, %s49
    %s67 = sphi 0, %s67
    %s69 = sphi 0, %s67
    %s70 = sphi 0, %s69
    %s84 = sphi 0, %s70
    %s88 = sphi 0, %s88
    %s90 = sphi 0, %s88
    %s91 = sphi 0, %s90
    %s105 = sphi 0, %s91
    %s111 = sphi 0, %s113
    %s114 = sphi 0, %s111
    %s115 = sphi 0, %s114
    %s131 = sphi 0, %s115
    %s137 = sphi 0, %s139
    %s140 = sphi 0, %s137
    %s141 = sphi 0, %s140
    %s157 = sphi 0, %s141
  $region4: #{gcne_forward.4} parent=0 // loop_header_branch
    %15 = sbr.rel (%p13) target = $region8
  $region5: #{gcne_forward.4} parent=0 // loop_body
    %s17 = ssub.s32 %s12, 1
    %s18 = ssub.s32 %s12, 2
    %s19 = sadd.s32 %s12, 1
    %s20 = ssub.s32 %s12, %s19
    %p21 = scmp.eq.s32.totalorder %s20, 0
    %s23 = sadd.s32 %s22, 1
    %s24 = scalar_select %p21, %s22, %s23
    %p27 = pneg %p21
    %p28 = scmp.eq.s32.totalorder %s12, 1
    %p29 = por %p27, %p28
    %p30 = scmp.ne.s32.totalorder %s22, %s25
    %p31 = scmp.eq.s32.totalorder %s12, 0
    %p32 = por %p30, %p31
    %p33 = scmp.ne.s32.totalorder %s22, %s25
    %p34 = scmp.eq.s32.totalorder %s17, 1
    %p35 = por %p33, %p34
    %p36 = scmp.ne.s32.totalorder %s25, %s26
    %p37 = scmp.eq.s32.totalorder %s17, 0
    %p38 = por %p36, %p37
    %p39 = scmp.ne.s32.totalorder %s25, %s26
    %p40 = scmp.eq.s32.totalorder %s18, 1
    %p41 = por %p39, %p40
    %p43 = scmp.ne.s32.totalorder %s26, %s42
    %p44 = scmp.eq.s32.totalorder %s18, 0
    %p45 = por %p43, %p44
    %s47 = sadd.s32 %s46, 1
    %p50 = scmp.eq.s32.totalorder %s12, 1
    %p51 = scmp.ne.s32.totalorder %s46, %s48
    %p52 = scmp.eq.s32.totalorder %s12, 0
    %p53 = por %p51, %p52
    %p54 = scmp.ne.s32.totalorder %s46, %s48
    %p55 = scmp.eq.s32.totalorder %s17, 1
    %p56 = por %p54, %p55
    %p57 = scmp.ne.s32.totalorder %s48, %s49
    %p58 = scmp.eq.s32.totalorder %s17, 0
    %p59 = por %p57, %p58
    %p60 = scmp.ne.s32.totalorder %s48, %s49
    %p61 = scmp.eq.s32.totalorder %s18, 1
    %p62 = por %p60, %p61
    %p64 = scmp.ne.s32.totalorder %s49, %s63
    %p65 = scmp.eq.s32.totalorder %s18, 0
    %p66 = por %p64, %p65
    %s68 = sadd.s32 %s67, 1
    %p71 = scmp.eq.s32.totalorder %s12, 1
    %p72 = scmp.ne.s32.totalorder %s67, %s69
    %p73 = scmp.eq.s32.totalorder %s12, 0
    %p74 = por %p72, %p73
    %p75 = scmp.ne.s32.totalorder %s67, %s69
    %p76 = scmp.eq.s32.totalorder %s17, 1
    %p77 = por %p75, %p76
    %p78 = scmp.ne.s32.totalorder %s69, %s70
    %p79 = scmp.eq.s32.totalorder %s17, 0
    %p80 = por %p78, %p79
    %p81 = scmp.ne.s32.totalorder %s69, %s70
    %p82 = scmp.eq.s32.totalorder %s18, 1
    %p83 = por %p81, %p82
    %p85 = scmp.ne.s32.totalorder %s70, %s84
    %p86 = scmp.eq.s32.totalorder %s18, 0
    %p87 = por %p85, %p86
    %s89 = sadd.s32 %s88, 1
    %p92 = scmp.eq.s32.totalorder %s12, 1
    %p93 = scmp.ne.s32.totalorder %s88, %s90
    %p94 = scmp.eq.s32.totalorder %s12, 0
    %p95 = por %p93, %p94
    %p96 = scmp.ne.s32.totalorder %s88, %s90
    %p97 = scmp.eq.s32.totalorder %s17, 1
    %p98 = por %p96, %p97
    %p99 = scmp.ne.s32.totalorder %s90, %s91
    %p100 = scmp.eq.s32.totalorder %s17, 0
    %p101 = por %p99, %p100
    %p102 = scmp.ne.s32.totalorder %s90, %s91
    %p103 = scmp.eq.s32.totalorder %s18, 1
    %p104 = por %p102, %p103
    %p106 = scmp.ne.s32.totalorder %s91, %s105
    %p107 = scmp.eq.s32.totalorder %s18, 0
    %p108 = por %p106, %p107
    %s109 = ssub.s32 %s12, %s19
    %p110 = scmp.eq.s32.totalorder %s109, 0
    %s112 = sadd.s32 %s111, 1
    %s113 = scalar_select %p110, %s111, %s112
    %p116 = pneg %p110
    %p117 = scmp.eq.s32.totalorder %s12, 1
    %p118 = por %p116, %p117
    %p119 = scmp.ne.s32.totalorder %s111, %s114
    %p120 = scmp.eq.s32.totalorder %s12, 0
    %p121 = por %p119, %p120
    %p122 = scmp.ne.s32.totalorder %s111, %s114
    %p123 = scmp.eq.s32.totalorder %s17, 1
    %p124 = por %p122, %p123
    %p125 = scmp.ne.s32.totalorder %s114, %s115
    %p126 = scmp.eq.s32.totalorder %s17, 0
    %p127 = por %p125, %p126
    %p128 = scmp.ne.s32.totalorder %s114, %s115
    %p129 = scmp.eq.s32.totalorder %s18, 1
    %p130 = por %p128, %p129
    %p132 = scmp.ne.s32.totalorder %s115, %s131
    %p133 = scmp.eq.s32.totalorder %s18, 0
    %p134 = por %p132, %p133
    %s135 = ssub.s32 %s12, %s19
    %p136 = scmp.eq.s32.totalorder %s135, 0
    %s138 = sadd.s32 %s137, 1
    %s139 = scalar_select %p136, %s137, %s138
    %p142 = pneg %p136
    %p143 = scmp.eq.s32.totalorder %s12, 1
    %p144 = por %p142, %p143
    %p145 = scmp.ne.s32.totalorder %s137, %s140
    %p146 = scmp.eq.s32.totalorder %s12, 0
    %p147 = por %p145, %p146
    %p148 = scmp.ne.s32.totalorder %s137, %s140
    %p149 = scmp.eq.s32.totalorder %s17, 1
    %p150 = por %p148, %p149
    %p151 = scmp.ne.s32.totalorder %s140, %s141
    %p152 = scmp.eq.s32.totalorder %s17, 0
    %p153 = por %p151, %p152
    %p154 = scmp.ne.s32.totalorder %s140, %s141
    %p155 = scmp.eq.s32.totalorder %s18, 1
    %p156 = por %p154, %p155
    %p158 = scmp.ne.s32.totalorder %s141, %s157
    %p159 = scmp.eq.s32.totalorder %s18, 0
    %p160 = por %p158, %p159
    %p161 = scmp.le.s32.totalorder 1, %s12
    %p162 = scmp.lt.s32.totalorder %s12, 3
    %p163 = pnand %p161, %p162
    %p164 = pneg %p163
    // Predicated region
    $region9: #{gcne_forward.4} parent=5 // pred_check
      _
    $region10: #{gcne_forward.4} parent=5 // pred_check_branch
      %166 = sbr.rel (%p163) target = $region12
    $region11: #{gcne_forward.4} parent=5 // pred_region
      %s167 = ssub.s32 %s12, 1
      // Predicated region
      $region13: #{gcne_forward.4} parent=11 // pred_check
        %p168 = pneg %p59
      $region14: #{gcne_forward.4} parent=11 // pred_check_branch
        %170 = sbr.rel (%p168) target = $region16
      $region15: #{gcne_forward.4} parent=11 // pred_region
        _
      $region16: #{gcne_forward.4} parent=11 // pred_fallthru
        _
      // Predicated region
      $region17: #{gcne_forward.4} parent=11 // pred_check
        %p171 = pneg %p80
      $region18: #{gcne_forward.4} parent=11 // pred_check_branch
        %173 = sbr.rel (%p171) target = $region20
      $region19: #{gcne_forward.4} parent=11 // pred_region
        _
      $region20: #{gcne_forward.4} parent=11 // pred_fallthru
        _
      // Predicated region
      $region21: #{gcne_forward.4} parent=11 // pred_check
        %p174 = pneg %p101
      $region22: #{gcne_forward.4} parent=11 // pred_check_branch
        %176 = sbr.rel (%p174) target = $region24
      $region23: #{gcne_forward.4} parent=11 // pred_region
        _
      $region24: #{gcne_forward.4} parent=11 // pred_fallthru
        _
    $region12: #{gcne_forward.4} parent=5 // pred_fallthru
      _
    %p177 = scmp.lt.s32.totalorder %s12, 2
    // Predicated region
    $region25: #{gcne_forward.4} parent=5 // pred_check
      %p178 = pneg %p177
    $region26: #{gcne_forward.4} parent=5 // pred_check_branch
      %180 = sbr.rel (%p178) target = $region28
    $region27: #{gcne_forward.4} parent=5 // pred_region
      // Predicated region
      $region29: #{gcne_forward.4} parent=27 // pred_check
        %p181 = pneg %p32
      $region30: #{gcne_forward.4} parent=27 // pred_check_branch
        %183 = sbr.rel (%p181) target = $region32
      $region31: #{gcne_forward.4} parent=27 // pred_region
        %s184 = smul.u32 16, %s12
        %p185 = scmp.lt.s32.totalorder %s184, 31
        %s186 = scalar_select %p185, %s184, 31
        %s187 = smul.addr %s186, 2
        %s188 = smul.addr %s187, 4
        %s189 = scalar_lea.vmem %s0, %s188
        %s190 = smul.u32 16, %s12
      $region32: #{gcne_forward.4} parent=27 // pred_fallthru
        _
    $region28: #{gcne_forward.4} parent=5 // pred_fallthru
      _
    %p191 = scmp.le.s32.totalorder 1, %s12
    %p192 = scmp.lt.s32.totalorder %s12, 3
    %p193 = pnand %p191, %p192
    %p194 = pneg %p193
    // Predicated region
    $region33: #{gcne_forward.4} parent=5 // pred_check
      _
    $region34: #{gcne_forward.4} parent=5 // pred_check_branch
      %196 = sbr.rel (%p193) target = $region36
    $region35: #{gcne_forward.4} parent=5 // pred_region
      %s197 = ssub.s32 %s12, 1
      %s198 = smul.u32 16, %s17
      %p199 = scmp.lt.s32.totalorder %s198, 31
      %s200 = scalar_select %p199, %s198, 31
      %s201 = smul.addr %s200, 2
      %s202 = smul.addr %s201, 4
      %s203 = scalar_lea.vmem %s0, %s202
      %p204 = pneg %p38
      %p205 = pneg %p35
      %p206 = pneg %p59
      %p207 = pneg %p56
      %p208 = pneg %p80
      %p209 = pneg %p77
      %p210 = pneg %p101
      %p211 = pneg %p98
      %p212 = pneg %p127
      %p213 = pneg %p124
      %s214 = smul.u32 16, %s17
      %p215 = scmp.lt.s32.totalorder %s214, 31
      %s216 = scalar_select %p215, %s214, 31
      %s217 = smul.addr %s216, 8
      %s218 = scalar_lea.vmem %s4, %s217
      %p219 = pneg %p153
      %p220 = pneg %p150
      %p221 = scmp.lt.s32.totalorder %s17, 1
      %s222 = scalar_select %p221, %s17, 1
      %s223 = smul.addr %s222, 2
      %s224 = scalar_lea.vmem %s5, %s223
      %s225 = smul.u32 16, %s17
      %p226 = scmp.lt.s32.totalorder %s225, 31
      %s227 = scalar_select %p226, %s225, 31
      %s228 = smul.addr %s227, 2
      %s229 = smul.addr %s228, 4
      %s230 = scalar_lea.vmem %s0, %s229
      %s231 = smul.u32 16, %s17
      %s232 = smul.u32 16, %s17
      %p233 = scmp.lt.s32.totalorder %s232, 31
      %s234 = scalar_select %p233, %s232, 31
      %s235 = smul.addr %s234, 8
      %s236 = scalar_lea.vmem %s4, %s235
      %s237 = smul.u32 16, %s17
      %p238 = scmp.lt.s32.totalorder %s17, 1
      %s239 = scalar_select %p238, %s17, 1
      %s240 = smul.addr %s239, 2
      %s241 = scalar_lea.vmem %s5, %s240
      %v243 = vld [vmem:[%s230] sm:$0xff]
      %v244 = vld [vmem:[%s230 + $0x8] sm:$0xff]
      %v245 = vld [vmem:[%s230 + $0x10] sm:$0xff]
      %v246 = vld [vmem:[%s230 + $0x18] sm:$0xff]
      %v247 = vld [vmem:[%s230 + $0x20] sm:$0xff]
      %v248 = vld [vmem:[%s230 + $0x28] sm:$0xff]
      %v249 = vld [vmem:[%s230 + $0x30] sm:$0xff]
      %v250 = vld [vmem:[%s230 + $0x38] sm:$0xff]
      %v251 = vld [vmem:[%s230 + $0x40] sm:$0xff]
      %v252 = vld [vmem:[%s230 + $0x48] sm:$0xff]
      %v253 = vld [vmem:[%s230 + $0x50] sm:$0xff]
      %v254 = vld [vmem:[%s230 + $0x58] sm:$0xff]
      %v255 = vld [vmem:[%s230 + $0x60] sm:$0xff]
      %v256 = vld [vmem:[%s230 + $0x68] sm:$0xff]
      %v257 = vld [vmem:[%s230 + $0x70] sm:$0xff]
      %v258 = vld [vmem:[%s230 + $0x78] sm:$0xff]
      %v259 = vld [vmem:[%s1] sm:$0xf]
      %v260 = vld [vmem:[%s1 + $0x4] sm:$0xf]
      %v261 = vld [vmem:[%s1 + $0x8] sm:$0xf]
      %v262 = vld [vmem:[%s1 + $0xc] sm:$0xf]
      %v263 = vld [vmem:[%s1 + $0x10] sm:$0xf]
      %v264 = vld [vmem:[%s1 + $0x14] sm:$0xf]
      %v265 = vld [vmem:[%s1 + $0x18] sm:$0xf]
      %v266 = vld [vmem:[%s1 + $0x1c] sm:$0xf]
      %v267 = vld [vmem:[%s1 + $0x20] sm:$0xf]
      %v268 = vld [vmem:[%s1 + $0x24] sm:$0xf]
      %v269 = vld [vmem:[%s1 + $0x28] sm:$0xf]
      %v270 = vld [vmem:[%s1 + $0x2c] sm:$0xf]
      %v271 = vld [vmem:[%s1 + $0x30] sm:$0xf]
      %v272 = vld [vmem:[%s1 + $0x34] sm:$0xf]
      %v273 = vld [vmem:[%s1 + $0x38] sm:$0xf]
      %v274 = vld [vmem:[%s1 + $0x3c] sm:$0xf]
      %v275 = vld [vmem:[%s1 + $0x40] sm:$0xf]
      %v276 = vld [vmem:[%s1 + $0x44] sm:$0xf]
      %v277 = vld [vmem:[%s1 + $0x48] sm:$0xf]
      %v278 = vld [vmem:[%s1 + $0x4c] sm:$0xf]
      %v279 = vld [vmem:[%s1 + $0x50] sm:$0xf]
      %v280 = vld [vmem:[%s1 + $0x54] sm:$0xf]
      %v281 = vld [vmem:[%s1 + $0x58] sm:$0xf]
      %v282 = vld [vmem:[%s1 + $0x5c] sm:$0xf]
      %v283 = vld [vmem:[%s1 + $0x60] sm:$0xf]
      %v284 = vld [vmem:[%s1 + $0x64] sm:$0xf]
      %v285 = vld [vmem:[%s1 + $0x68] sm:$0xf]
      %v286 = vld [vmem:[%s1 + $0x6c] sm:$0xf]
      %v287 = vld [vmem:[%s1 + $0x70] sm:$0xf]
      %v288 = vld [vmem:[%s1 + $0x74] sm:$0xf]
      %v289 = vld [vmem:[%s1 + $0x78] sm:$0xf]
      %v290 = vld [vmem:[%s1 + $0x7c] sm:$0xf]
      %v291 = vld [vmem:[%s2] sm:$0x1]
      %v293 = vlaneseq
      %v294 = vshrl.u32 %v293, 7
      %v295 = vsub.s32 0, %v294
      %v296 = vrot.slane %v291, %v295
      %v314 = vunpack.c.l.b16 %v243
      %v315 = vunpack.c.h.b16 %v243
      %v316 = vunpack.c.l.b16 %v244
      %v317 = vunpack.c.h.b16 %v244
      %v318 = vunpack.c.l.b16 %v245
      %v319 = vunpack.c.h.b16 %v245
      %v320 = vunpack.c.l.b16 %v246
      %v321 = vunpack.c.h.b16 %v246
      %v322 = vunpack.c.l.b16 %v247
      %v323 = vunpack.c.h.b16 %v247
      %v324 = vunpack.c.l.b16 %v248
      %v325 = vunpack.c.h.b16 %v248
      %v326 = vunpack.c.l.b16 %v249
      %v327 = vunpack.c.h.b16 %v249
      %v328 = vunpack.c.l.b16 %v250
      %v329 = vunpack.c.h.b16 %v250
      %v330 = vunpack.c.l.b16 %v251
      %v331 = vunpack.c.h.b16 %v251
      %v332 = vunpack.c.l.b16 %v252
      %v333 = vunpack.c.h.b16 %v252
      %v334 = vunpack.c.l.b16 %v253
      %v335 = vunpack.c.h.b16 %v253
      %v336 = vunpack.c.l.b16 %v254
      %v337 = vunpack.c.h.b16 %v254
      %v338 = vunpack.c.l.b16 %v255
      %v339 = vunpack.c.h.b16 %v255
      %v340 = vunpack.c.l.b16 %v256
      %v341 = vunpack.c.h.b16 %v256
      %v342 = vunpack.c.l.b16 %v257
      %v343 = vunpack.c.h.b16 %v257
      %v344 = vunpack.c.l.b16 %v258
      %v345 = vunpack.c.h.b16 %v258
      %v346 = vpack.c.b16 %v316, %v314
      %v347 = vpack.c.b16 %v317, %v315
      %v348 = vpack.c.b16 %v320, %v318
      %v349 = vpack.c.b16 %v321, %v319
      %v350 = vpack.c.b16 %v324, %v322
      %v351 = vpack.c.b16 %v325, %v323
      %v352 = vpack.c.b16 %v328, %v326
      %v353 = vpack.c.b16 %v329, %v327
      %v354 = vpack.c.b16 %v332, %v330
      %v355 = vpack.c.b16 %v333, %v331
      %v356 = vpack.c.b16 %v336, %v334
      %v357 = vpack.c.b16 %v337, %v335
      %v358 = vpack.c.b16 %v340, %v338
      %v359 = vpack.c.b16 %v341, %v339
      %v360 = vpack.c.b16 %v344, %v342
      %v361 = vpack.c.b16 %v345, %v343
      %v410 = vunpack.c.l.b16 %v259
      %v411 = vunpack.c.l.b16 %v260
      %v412 = vunpack.c.l.b16 %v261
      %v413 = vunpack.c.l.b16 %v262
      %v414 = vunpack.c.l.b16 %v263
      %v415 = vunpack.c.l.b16 %v264
      %v416 = vunpack.c.l.b16 %v265
      %v417 = vunpack.c.l.b16 %v266
      %v418 = vunpack.c.l.b16 %v267
      %v419 = vunpack.c.l.b16 %v268
      %v420 = vunpack.c.l.b16 %v269
      %v421 = vunpack.c.l.b16 %v270
      %v422 = vunpack.c.l.b16 %v271
      %v423 = vunpack.c.l.b16 %v272
      %v424 = vunpack.c.l.b16 %v273
      %v425 = vunpack.c.l.b16 %v274
      %v426 = vunpack.c.l.b16 %v275
      %v427 = vunpack.c.l.b16 %v276
      %v428 = vunpack.c.l.b16 %v277
      %v429 = vunpack.c.l.b16 %v278
      %v430 = vunpack.c.l.b16 %v279
      %v431 = vunpack.c.l.b16 %v280
      %v432 = vunpack.c.l.b16 %v281
      %v433 = vunpack.c.l.b16 %v282
      %v434 = vunpack.c.l.b16 %v283
      %v435 = vunpack.c.l.b16 %v284
      %v436 = vunpack.c.l.b16 %v285
      %v437 = vunpack.c.l.b16 %v286
      %v438 = vunpack.c.l.b16 %v287
      %v439 = vunpack.c.l.b16 %v288
      %v440 = vunpack.c.l.b16 %v289
      %v441 = vunpack.c.l.b16 %v290
      %v442 = vpack.c.b16 %v411, %v410
      %v443 = vpack.c.b16 %v413, %v412
      %v444 = vpack.c.b16 %v415, %v414
      %v445 = vpack.c.b16 %v417, %v416
      %v446 = vpack.c.b16 %v419, %v418
      %v447 = vpack.c.b16 %v421, %v420
      %v448 = vpack.c.b16 %v423, %v422
      %v449 = vpack.c.b16 %v425, %v424
      %v450 = vpack.c.b16 %v427, %v426
      %v451 = vpack.c.b16 %v429, %v428
      %v452 = vpack.c.b16 %v431, %v430
      %v453 = vpack.c.b16 %v433, %v432
      %v454 = vpack.c.b16 %v435, %v434
      %v455 = vpack.c.b16 %v437, %v436
      %v456 = vpack.c.b16 %v439, %v438
      %v457 = vpack.c.b16 %v441, %v440
      %474 = vmatprep.subr.bf16.mxu0 0
      %475 = vmatpush1.bf16.msra.mxu0 %v442
      %476 = vmatprep.subr.bf16.mxu0 0
      %477 = vmatpush1.bf16.msra.mxu0 %v443
      %478 = vmatprep.subr.bf16.mxu0 0
      %479 = vmatpush1.bf16.msra.mxu0 %v444
      %480 = vmatprep.subr.bf16.mxu0 0
      %481 = vmatpush1.bf16.msra.mxu0 %v445
      %482 = vmatprep.subr.bf16.mxu0 0
      %483 = vmatpush1.bf16.msra.mxu0 %v446
      %484 = vmatprep.subr.bf16.mxu0 0
      %485 = vmatpush1.bf16.msra.mxu0 %v447
      %486 = vmatprep.subr.bf16.mxu0 0
      %487 = vmatpush1.bf16.msra.mxu0 %v448
      %488 = vmatprep.subr.bf16.mxu0 0
      %489 = vmatpush1.bf16.msra.mxu0 %v449
      %490 = vmatprep.subr.bf16.mxu0 0
      %491 = vmatpush1.bf16.msra.mxu0 %v450
      %492 = vmatprep.subr.bf16.mxu0 0
      %493 = vmatpush1.bf16.msra.mxu0 %v451
      %494 = vmatprep.subr.bf16.mxu0 0
      %495 = vmatpush1.bf16.msra.mxu0 %v452
      %496 = vmatprep.subr.bf16.mxu0 0
      %497 = vmatpush1.bf16.msra.mxu0 %v453
      %498 = vmatprep.subr.bf16.mxu0 0
      %499 = vmatpush1.bf16.msra.mxu0 %v454
      %500 = vmatprep.subr.bf16.mxu0 0
      %501 = vmatpush1.bf16.msra.mxu0 %v455
      %502 = vmatprep.subr.bf16.mxu0 0
      %503 = vmatpush1.bf16.msra.mxu0 %v456
      %504 = vmatprep.subr.bf16.mxu0 0
      %505 = vmatpush1.bf16.msra.mxu0 %v457
      %506 = vmatprep.mubr.bf16.mxu0 %v347
      %507 = vmatmul.mubr.bf16.gmra.mrb[0].mxu0 %v346
      %v508 = vpop.f32.mrb[0].mxu0
      %v509 = vadd.f32 %v296, %v508
      %v510 = vpop.f32.mrb[0].mxu0
      %v511 = vpop.f32.mrb[0].mxu0
      %v512 = vadd.f32 %v296, %v511
      %v513 = vpop.f32.mrb[0].mxu0
      %514 = vmatprep.mubr.bf16.mxu0 %v349
      %515 = vmatmul.mubr.bf16.gmra.mrb[0].mxu0 %v348
      %v516 = vpop.f32.mrb[0].mxu0
      %v517 = vadd.f32 %v296, %v516
      %v518 = vpop.f32.mrb[0].mxu0
      %v519 = vpop.f32.mrb[0].mxu0
      %v520 = vadd.f32 %v296, %v519
      %v521 = vpop.f32.mrb[0].mxu0
      %522 = vmatprep.mubr.bf16.mxu0 %v351
      %523 = vmatmul.mubr.bf16.gmra.mrb[0].mxu0 %v350
      %v524 = vpop.f32.mrb[0].mxu0
      %v525 = vadd.f32 %v296, %v524
      %v526 = vpop.f32.mrb[0].mxu0
      %v527 = vpop.f32.mrb[0].mxu0
      %v528 = vadd.f32 %v296, %v527
      %v529 = vpop.f32.mrb[0].mxu0
      %530 = vmatprep.mubr.bf16.mxu0 %v353
      %531 = vmatmul.mubr.bf16.gmra.mrb[0].mxu0 %v352
      %v532 = vpop.f32.mrb[0].mxu0
      %v533 = vadd.f32 %v296, %v532
      %v534 = vpop.f32.mrb[0].mxu0
      %v535 = vpop.f32.mrb[0].mxu0
      %v536 = vadd.f32 %v296, %v535
      %v537 = vpop.f32.mrb[0].mxu0
      %538 = vmatprep.mubr.bf16.mxu0 %v355
      %539 = vmatmul.mubr.bf16.gmra.mrb[0].mxu0 %v354
      %v540 = vpop.f32.mrb[0].mxu0
      %v541 = vadd.f32 %v296, %v540
      %v542 = vpop.f32.mrb[0].mxu0
      %v543 = vpop.f32.mrb[0].mxu0
      %v544 = vadd.f32 %v296, %v543
      %v545 = vpop.f32.mrb[0].mxu0
      %546 = vmatprep.mubr.bf16.mxu0 %v357
      %547 = vmatmul.mubr.bf16.gmra.mrb[0].mxu0 %v356
      %v548 = vpop.f32.mrb[0].mxu0
      %v549 = vadd.f32 %v296, %v548
      %v550 = vpop.f32.mrb[0].mxu0
      %v551 = vpop.f32.mrb[0].mxu0
      %v552 = vadd.f32 %v296, %v551
      %v553 = vpop.f32.mrb[0].mxu0
      %554 = vmatprep.mubr.bf16.mxu0 %v359
      %555 = vmatmul.mubr.bf16.gmra.mrb[0].mxu0 %v358
      %v556 = vpop.f32.mrb[0].mxu0
      %v557 = vadd.f32 %v296, %v556
      %v558 = vpop.f32.mrb[0].mxu0
      %v559 = vpop.f32.mrb[0].mxu0
      %v560 = vadd.f32 %v296, %v559
      %v561 = vpop.f32.mrb[0].mxu0
      %562 = vmatprep.mubr.bf16.mxu0 %v361
      %563 = vmatmul.mubr.bf16.gmra.mrb[0].mxu0 %v360
      %v564 = vpop.f32.mrb[0].mxu0
      %v565 = vadd.f32 %v296, %v564
      %v566 = vpop.f32.mrb[0].mxu0
      %v567 = vpop.f32.mrb[0].mxu0
      %v568 = vadd.f32 %v296, %v567
      %v569 = vpop.f32.mrb[0].mxu0
      %570 = vdwg.mxu0
      %v571 = vmax.f32 %v509, 0.0
      %v572 = vmax.f32 %v512, 0.0
      %v573 = vmax.f32 %v517, 0.0
      %v574 = vmax.f32 %v520, 0.0
      %v575 = vmax.f32 %v525, 0.0
      %v576 = vmax.f32 %v528, 0.0
      %v577 = vmax.f32 %v533, 0.0
      %v578 = vmax.f32 %v536, 0.0
      %v579 = vmax.f32 %v541, 0.0
      %v580 = vmax.f32 %v544, 0.0
      %v581 = vmax.f32 %v549, 0.0
      %v582 = vmax.f32 %v552, 0.0
      %v583 = vmax.f32 %v557, 0.0
      %v584 = vmax.f32 %v560, 0.0
      %v585 = vmax.f32 %v565, 0.0
      %v586 = vmax.f32 %v568, 0.0
      %587 = vst [vmem:[%s236] sm:$0xff] %v571
      %588 = vst [vmem:[%s236 + $0x8] sm:$0xff] %v572
      %589 = vst [vmem:[%s236 + $0x10] sm:$0xff] %v573
      %590 = vst [vmem:[%s236 + $0x18] sm:$0xff] %v574
      %591 = vst [vmem:[%s236 + $0x20] sm:$0xff] %v575
      %592 = vst [vmem:[%s236 + $0x28] sm:$0xff] %v576
      %593 = vst [vmem:[%s236 + $0x30] sm:$0xff] %v577
      %594 = vst [vmem:[%s236 + $0x38] sm:$0xff] %v578
      %595 = vst [vmem:[%s236 + $0x40] sm:$0xff] %v579
      %596 = vst [vmem:[%s236 + $0x48] sm:$0xff] %v580
      %597 = vst [vmem:[%s236 + $0x50] sm:$0xff] %v581
      %598 = vst [vmem:[%s236 + $0x58] sm:$0xff] %v582
      %599 = vst [vmem:[%s236 + $0x60] sm:$0xff] %v583
      %600 = vst [vmem:[%s236 + $0x68] sm:$0xff] %v584
      %601 = vst [vmem:[%s236 + $0x70] sm:$0xff] %v585
      %602 = vst [vmem:[%s236 + $0x78] sm:$0xff] %v586
      %v603 = vld [vmem:[%s3] sm:$0x3]
      %604 = vmatprep.subr.mxu0 0.0
      %605 = vmatpush1.xpose.msra.mxu0 %v571
      %606 = vmatprep.subr.mxu0 0.0
      %607 = vmatpush1.xpose.msra.mxu0 %v572
      %608 = vmatprep.subr.mxu0 0.0
      %609 = vmatpush1.xpose.msra.mxu0 %v573
      %610 = vmatprep.subr.mxu0 0.0
      %611 = vmatpush1.xpose.msra.mxu0 %v574
      %612 = vmatprep.subr.mxu0 0.0
      %613 = vmatpush1.xpose.msra.mxu0 %v575
      %614 = vmatprep.subr.mxu0 0.0
      %615 = vmatpush1.xpose.msra.mxu0 %v576
      %616 = vmatprep.subr.mxu0 0.0
      %617 = vmatpush1.xpose.msra.mxu0 %v577
      %618 = vmatprep.subr.mxu0 0.0
      %619 = vmatpush1.xpose.msra.mxu0 %v578
      %620 = vmatprep.subr.mxu0 0.0
      %621 = vmatpush1.xpose.msra.mxu0 %v579
      %622 = vmatprep.subr.mxu0 0.0
      %623 = vmatpush1.xpose.msra.mxu0 %v580
      %624 = vmatprep.subr.mxu0 0.0
      %625 = vmatpush1.xpose.msra.mxu0 %v581
      %626 = vmatprep.subr.mxu0 0.0
      %627 = vmatpush1.xpose.msra.mxu0 %v582
      %628 = vmatprep.subr.mxu0 0.0
      %629 = vmatpush1.xpose.msra.mxu0 %v583
      %630 = vmatprep.subr.mxu0 0.0
      %631 = vmatpush1.xpose.msra.mxu0 %v584
      %632 = vmatprep.subr.mxu0 0.0
      %633 = vmatpush1.xpose.msra.mxu0 %v585
      %634 = vmatprep.subr.mxu0 0.0
      %635 = vmatpush1.xpose.msra.mxu0 %v586
      %636 = vmatprep.subr.mxu0 0.0
      %637 = vmatpush1.xpose.msra.mxu0 0.0
      %638 = vmatprep.subr.mxu0 0.0
      %639 = vmatpush1.xpose.msra.mxu0 0.0
      %640 = vmatprep.subr.mxu0 0.0
      %641 = vmatpush1.xpose.msra.mxu0 0.0
      %642 = vmatprep.subr.mxu0 0.0
      %643 = vmatpush1.xpose.msra.mxu0 0.0
      %644 = vmatprep.subr.mxu0 0.0
      %645 = vmatpush1.xpose.msra.mxu0 0.0
      %646 = vmatprep.subr.mxu0 0.0
      %647 = vmatpush1.xpose.msra.mxu0 0.0
      %648 = vmatprep.subr.mxu0 0.0
      %649 = vmatpush1.xpose.msra.mxu0 0.0
      %650 = vmatprep.subr.mxu0 0.0
      %651 = vmatpush1.xpose.msra.mxu0 0.0
      %652 = vmatprep.subr.mxu0 0.0
      %653 = vmatpush1.xpose.msra.mxu0 0.0
      %654 = vmatprep.subr.mxu0 0.0
      %655 = vmatpush1.xpose.msra.mxu0 0.0
      %656 = vmatprep.subr.mxu0 0.0
      %657 = vmatpush1.xpose.msra.mxu0 0.0
      %658 = vmatprep.subr.mxu0 0.0
      %659 = vmatpush1.xpose.msra.mxu0 0.0
      %660 = vmatprep.subr.mxu0 0.0
      %661 = vmatpush1.xpose.msra.mxu0 0.0
      %662 = vmatprep.subr.mxu0 0.0
      %663 = vmatpush1.xpose.msra.mxu0 0.0
      %664 = vmatprep.subr.mxu0 0.0
      %665 = vmatpush1.xpose.msra.mxu0 0.0
      %666 = vmatprep.subr.mxu0 0.0
      %667 = vmatpush1.xpose.msra.mxu0 0.0
      %668 = vmatprep.mubr.f32.mxu0 0.0
      %669 = vmatmul.mubr.f32.gmra.mrb[0].mxu0 %v603
      %v670 = vpop.f32.mrb[0].mxu0
      %v671 = vadd.f32 0.0, %v670
      %v672 = vpop.f32.mrb[0].mxu0
      %673 = vdwg.mxu0
      %674 = vst [vmem:[%s241] sm:$0x3] %v671
      %s675 = smul.u32 16, %s17
      %p676 = scmp.lt.s32.totalorder %s675, 31
      %s677 = scalar_select %p676, %s675, 31
      %s678 = smul.addr %s677, 8
      %s679 = scalar_lea.vmem %s4, %s678
      %p680 = scmp.lt.s32.totalorder %s17, 1
      %s681 = scalar_select %p680, %s17, 1
      %s682 = smul.addr %s681, 2
      %s683 = scalar_lea.vmem %s5, %s682
      // Predicated region
      $region37: #{gcne_forward.4} parent=35 // pred_check
        %p684 = pneg %p124
      $region38: #{gcne_forward.4} parent=35 // pred_check_branch
        %686 = sbr.rel (%p684) target = $region40
      $region39: #{gcne_forward.4} parent=35 // pred_region
        %s687 = smul.u32 16, %s17
      $region40: #{gcne_forward.4} parent=35 // pred_fallthru
        _
      // Predicated region
      $region41: #{gcne_forward.4} parent=35 // pred_check
        %p688 = pneg %p150
      $region42: #{gcne_forward.4} parent=35 // pred_check_branch
        %690 = sbr.rel (%p688) target = $region44
      $region43: #{gcne_forward.4} parent=35 // pred_region
        _
      $region44: #{gcne_forward.4} parent=35 // pred_fallthru
        _
    $region36: #{gcne_forward.4} parent=5 // pred_fallthru
      _
    %p691 = scmp.le.s32.totalorder 2, %s12
    // Predicated region
    $region45: #{gcne_forward.4} parent=5 // pred_check
      %p692 = pneg %p691
    $region46: #{gcne_forward.4} parent=5 // pred_check_branch
      %694 = sbr.rel (%p692) target = $region48
    $region47: #{gcne_forward.4} parent=5 // pred_region
      %s695 = ssub.s32 %s12, 2
      // Predicated region
      $region49: #{gcne_forward.4} parent=47 // pred_check
        %p696 = pneg %p130
      $region50: #{gcne_forward.4} parent=47 // pred_check_branch
        %698 = sbr.rel (%p696) target = $region52
      $region51: #{gcne_forward.4} parent=47 // pred_region
        %s699 = smul.u32 16, %s18
        %p700 = scmp.lt.s32.totalorder %s699, 31
        %s701 = scalar_select %p700, %s699, 31
        %s702 = smul.addr %s701, 8
        %s703 = scalar_lea.vmem %s4, %s702
      $region52: #{gcne_forward.4} parent=47 // pred_fallthru
        _
      // Predicated region
      $region53: #{gcne_forward.4} parent=47 // pred_check
        %p704 = pneg %p156
      $region54: #{gcne_forward.4} parent=47 // pred_check_branch
        %706 = sbr.rel (%p704) target = $region56
      $region55: #{gcne_forward.4} parent=47 // pred_region
        %p707 = scmp.lt.s32.totalorder %s18, 1
        %s708 = scalar_select %p707, %s18, 1
        %s709 = smul.addr %s708, 2
        %s710 = scalar_lea.vmem %s5, %s709
      $region56: #{gcne_forward.4} parent=47 // pred_fallthru
        _
    $region48: #{gcne_forward.4} parent=5 // pred_fallthru
      _
  $region6: #{gcne_forward.4} parent=0 // loop_footer
    %s16 = sadd.s32 1, %s12
  $region7: #{gcne_forward.4} parent=0 // loop_footer_branch
    %11 = sbr.rel target = $region3
  $region8: #{gcne_forward.4} parent=0 // loop_exit
    _

// kernel: gcne_forward.6
$region0: #{gcne_forward.6}
  #allocation0 [shape = 'u32[]', space=smem, size = 0x4, offset = 0x4, fixed_abs, tag = 'smem constant byte address 0x4 - core index']
  #allocation1 [shape = 'u32[144,128]{1,0:T(1,128)}', space=vmem, size = 0x12000, scoped, tag = 'internal scratch']
  %s0 = inlined_call_operand.vmem [shape: bf16[256,256], index: 0, kind: input, shape index: {}]
  %s1 = inlined_call_operand.vmem [shape: bf16[256,128], index: 1, kind: input, shape index: {}]
  %s2 = inlined_call_operand.vmem [shape: f32[1,128], index: 2, kind: input, shape index: {}]
  %s3 = inlined_call_operand.vmem [shape: f32[2,128], index: 3, kind: input, shape index: {}]
  %s4 = inlined_call_operand.hbm [shape: f32[256,128], index: 4, kind: output, shape index: {0}]
  %s5 = inlined_call_operand.vmem [shape: f32[2,256], index: 5, kind: output, shape index: {1}]
  %6 = xla_tuple %s4, %s5
  %s7 = sld [smem:[#allocation0]]
  $region57: #{gcne_forward.6} parent=0
    _
  %s9 = ssub.s32 1, %s7
  %s10 = scalar_select 0, %s9, %s7
  $region1: #{gcne_forward.6} parent=0
    #allocation2 [shape = 'u8[131072]{0}', space=vmem, size = 0x20000, scoped, tag = 'output window, operand 0']
    #allocation3 [shape = 's32[2]{0}', space=sflag, size = 0x8, scoped, tag = 'scoped memory for gcne_forward.6']
    %11 = vsyncpa [#allocation3], 0
    %s12 = scalar_lea.sflag [#allocation3], 1
    %13 = vsyncpa %s12, 0
    loop: start=0, step=1, limit=4
    $region2: #{gcne_forward.6} parent=1 // loop_pre_header
      _
    $region3: #{gcne_forward.6} parent=1 // loop_header
      %s15 = sphi 0, %s19
      %p16 = scmp.ge.s32.totalorder %s15, 4
      %s25 = sphi 0, %s27
      %s28 = sphi 0, %s25
      %s29 = sphi 0, %s28
      %s45 = sphi 0, %s29
      %s49 = sphi 0, %s49
      %s51 = sphi 0, %s49
      %s52 = sphi 0, %s51
      %s66 = sphi 0, %s52
      %s70 = sphi 0, %s70
      %s72 = sphi 0, %s70
      %s73 = sphi 0, %s72
      %s87 = sphi 0, %s73
      %s91 = sphi 0, %s91
      %s93 = sphi 0, %s91
      %s94 = sphi 0, %s93
      %s108 = sphi 0, %s94
      %s114 = sphi 0, %s116
      %s117 = sphi 0, %s114
      %s118 = sphi 0, %s117
      %s134 = sphi 0, %s118
      %s140 = sphi 0, %s142
      %s143 = sphi 0, %s140
      %s144 = sphi 0, %s143
      %s160 = sphi 0, %s144
    $region4: #{gcne_forward.6} parent=1 // loop_header_branch
      %18 = sbr.rel (%p16) target = $region8
    $region5: #{gcne_forward.6} parent=1 // loop_body
      %s20 = ssub.s32 %s15, 1
      %s21 = ssub.s32 %s15, 2
      %s22 = sadd.s32 %s15, 1
      %s23 = ssub.s32 %s15, %s22
      %p24 = scmp.eq.s32.totalorder %s23, 0
      %s26 = sadd.s32 %s25, 1
      %s27 = scalar_select %p24, %s25, %s26
      %p30 = pneg %p24
      %p31 = scmp.eq.s32.totalorder %s15, 1
      %p32 = por %p30, %p31
      %p33 = scmp.ne.s32.totalorder %s25, %s28
      %p34 = scmp.eq.s32.totalorder %s15, 0
      %p35 = por %p33, %p34
      %p36 = scmp.ne.s32.totalorder %s25, %s28
      %p37 = scmp.eq.s32.totalorder %s20, 1
      %p38 = por %p36, %p37
      %p39 = scmp.ne.s32.totalorder %s28, %s29
      %p40 = scmp.eq.s32.totalorder %s20, 0
      %p41 = por %p39, %p40
      %p42 = scmp.ne.s32.totalorder %s28, %s29
      %p43 = scmp.eq.s32.totalorder %s21, 1
      %p44 = por %p42, %p43
      %p46 = scmp.ne.s32.totalorder %s29, %s45
      %p47 = scmp.eq.s32.totalorder %s21, 0
      %p48 = por %p46, %p47
      %s50 = sadd.s32 %s49, 1
      %p53 = scmp.eq.s32.totalorder %s15, 1
      %p54 = scmp.ne.s32.totalorder %s49, %s51
      %p55 = scmp.eq.s32.totalorder %s15, 0
      %p56 = por %p54, %p55
      %p57 = scmp.ne.s32.totalorder %s49, %s51
      %p58 = scmp.eq.s32.totalorder %s20, 1
      %p59 = por %p57, %p58
      %p60 = scmp.ne.s32.totalorder %s51, %s52
      %p61 = scmp.eq.s32.totalorder %s20, 0
      %p62 = por %p60, %p61
      %p63 = scmp.ne.s32.totalorder %s51, %s52
      %p64 = scmp.eq.s32.totalorder %s21, 1
      %p65 = por %p63, %p64
      %p67 = scmp.ne.s32.totalorder %s52, %s66
      %p68 = scmp.eq.s32.totalorder %s21, 0
      %p69 = por %p67, %p68
      %s71 = sadd.s32 %s70, 1
      %p74 = scmp.eq.s32.totalorder %s15, 1
      %p75 = scmp.ne.s32.totalorder %s70, %s72
      %p76 = scmp.eq.s32.totalorder %s15, 0
      %p77 = por %p75, %p76
      %p78 = scmp.ne.s32.totalorder %s70, %s72
      %p79 = scmp.eq.s32.totalorder %s20, 1
      %p80 = por %p78, %p79
      %p81 = scmp.ne.s32.totalorder %s72, %s73
      %p82 = scmp.eq.s32.totalorder %s20, 0
      %p83 = por %p81, %p82
      %p84 = scmp.ne.s32.totalorder %s72, %s73
      %p85 = scmp.eq.s32.totalorder %s21, 1
      %p86 = por %p84, %p85
      %p88 = scmp.ne.s32.totalorder %s73, %s87
      %p89 = scmp.eq.s32.totalorder %s21, 0
      %p90 = por %p88, %p89
      %s92 = sadd.s32 %s91, 1
      %p95 = scmp.eq.s32.totalorder %s15, 1
      %p96 = scmp.ne.s32.totalorder %s91, %s93
      %p97 = scmp.eq.s32.totalorder %s15, 0
      %p98 = por %p96, %p97
      %p99 = scmp.ne.s32.totalorder %s91, %s93
      %p100 = scmp.eq.s32.totalorder %s20, 1
      %p101 = por %p99, %p100
      %p102 = scmp.ne.s32.totalorder %s93, %s94
      %p103 = scmp.eq.s32.totalorder %s20, 0
      %p104 = por %p102, %p103
      %p105 = scmp.ne.s32.totalorder %s93, %s94
      %p106 = scmp.eq.s32.totalorder %s21, 1
      %p107 = por %p105, %p106
      %p109 = scmp.ne.s32.totalorder %s94, %s108
      %p110 = scmp.eq.s32.totalorder %s21, 0
      %p111 = por %p109, %p110
      %s112 = ssub.s32 %s15, %s22
      %p113 = scmp.eq.s32.totalorder %s112, 0
      %s115 = sadd.s32 %s114, 1
      %s116 = scalar_select %p113, %s114, %s115
      %p119 = pneg %p113
      %p120 = scmp.eq.s32.totalorder %s15, 1
      %p121 = por %p119, %p120
      %p122 = scmp.ne.s32.totalorder %s114, %s117
      %p123 = scmp.eq.s32.totalorder %s15, 0
      %p124 = por %p122, %p123
      %p125 = scmp.ne.s32.totalorder %s114, %s117
      %p126 = scmp.eq.s32.totalorder %s20, 1
      %p127 = por %p125, %p126
      %p128 = scmp.ne.s32.totalorder %s117, %s118
      %p129 = scmp.eq.s32.totalorder %s20, 0
      %p130 = por %p128, %p129
      %p131 = scmp.ne.s32.totalorder %s117, %s118
      %p132 = scmp.eq.s32.totalorder %s21, 1
      %p133 = por %p131, %p132
      %p135 = scmp.ne.s32.totalorder %s118, %s134
      %p136 = scmp.eq.s32.totalorder %s21, 0
      %p137 = por %p135, %p136
      %s138 = ssub.s32 %s15, %s22
      %p139 = scmp.eq.s32.totalorder %s138, 0
      %s141 = sadd.s32 %s140, 1
      %s142 = scalar_select %p139, %s140, %s141
      %p145 = pneg %p139
      %p146 = scmp.eq.s32.totalorder %s15, 1
      %p147 = por %p145, %p146
      %p148 = scmp.ne.s32.totalorder %s140, %s143
      %p149 = scmp.eq.s32.totalorder %s15, 0
      %p150 = por %p148, %p149
      %p151 = scmp.ne.s32.totalorder %s140, %s143
      %p152 = scmp.eq.s32.totalorder %s20, 1
      %p153 = por %p151, %p152
      %p154 = scmp.ne.s32.totalorder %s143, %s144
      %p155 = scmp.eq.s32.totalorder %s20, 0
      %p156 = por %p154, %p155
      %p157 = scmp.ne.s32.totalorder %s143, %s144
      %p158 = scmp.eq.s32.totalorder %s21, 1
      %p159 = por %p157, %p158
      %p161 = scmp.ne.s32.totalorder %s144, %s160
      %p162 = scmp.eq.s32.totalorder %s21, 0
      %p163 = por %p161, %p162
      %p164 = scmp.le.s32.totalorder 1, %s15
      %p165 = scmp.lt.s32.totalorder %s15, 3
      %p166 = pnand %p164, %p165
      %p167 = pneg %p166
      // Predicated region
      $region9: #{gcne_forward.6} parent=5 // pred_check
        _
      $region10: #{gcne_forward.6} parent=5 // pred_check_branch
        %169 = sbr.rel (%p166) target = $region12
      $region11: #{gcne_forward.6} parent=5 // pred_region
        %s170 = ssub.s32 %s15, 1
        // Predicated region
        $region13: #{gcne_forward.6} parent=11 // pred_check
          %p171 = pneg %p62
        $region14: #{gcne_forward.6} parent=11 // pred_check_branch
          %173 = sbr.rel (%p171) target = $region16
        $region15: #{gcne_forward.6} parent=11 // pred_region
          _
        $region16: #{gcne_forward.6} parent=11 // pred_fallthru
          _
        // Predicated region
        $region17: #{gcne_forward.6} parent=11 // pred_check
          %p174 = pneg %p83
        $region18: #{gcne_forward.6} parent=11 // pred_check_branch
          %176 = sbr.rel (%p174) target = $region20
        $region19: #{gcne_forward.6} parent=11 // pred_region
          _
        $region20: #{gcne_forward.6} parent=11 // pred_fallthru
          _
        // Predicated region
        $region21: #{gcne_forward.6} parent=11 // pred_check
          %p177 = pneg %p104
        $region22: #{gcne_forward.6} parent=11 // pred_check_branch
          %179 = sbr.rel (%p177) target = $region24
        $region23: #{gcne_forward.6} parent=11 // pred_region
          _
        $region24: #{gcne_forward.6} parent=11 // pred_fallthru
          _
      $region12: #{gcne_forward.6} parent=5 // pred_fallthru
        _
      %p180 = scmp.lt.s32.totalorder %s15, 2
      // Predicated region
      $region25: #{gcne_forward.6} parent=5 // pred_check
        %p181 = pneg %p180
      $region26: #{gcne_forward.6} parent=5 // pred_check_branch
        %183 = sbr.rel (%p181) target = $region28
      $region27: #{gcne_forward.6} parent=5 // pred_region
        // Predicated region
        $region29: #{gcne_forward.6} parent=27 // pred_check
          %p184 = pneg %p35
        $region30: #{gcne_forward.6} parent=27 // pred_check_branch
          %186 = sbr.rel (%p184) target = $region32
        $region31: #{gcne_forward.6} parent=27 // pred_region
          %s187 = smul.u32 16, %s15
          %p188 = scmp.lt.s32.totalorder %s187, 31
          %s189 = scalar_select %p188, %s187, 31
          %s190 = smul.addr %s189, 2
          %s191 = smul.addr %s190, 4
          %s192 = scalar_lea.vmem %s0, %s191
          %s193 = smul.u32 16, %s15
        $region32: #{gcne_forward.6} parent=27 // pred_fallthru
          _
      $region28: #{gcne_forward.6} parent=5 // pred_fallthru
        _
      %p194 = scmp.le.s32.totalorder 1, %s15
      %p195 = scmp.lt.s32.totalorder %s15, 3
      %p196 = pnand %p194, %p195
      %p197 = pneg %p196
      // Predicated region
      $region33: #{gcne_forward.6} parent=5 // pred_check
        _
      $region34: #{gcne_forward.6} parent=5 // pred_check_branch
        %199 = sbr.rel (%p196) target = $region36
      $region35: #{gcne_forward.6} parent=5 // pred_region
        %s200 = ssub.s32 %s15, 1
        %s201 = smul.u32 16, %s20
        %p202 = scmp.lt.s32.totalorder %s201, 31
        %s203 = scalar_select %p202, %s201, 31
        %s204 = smul.addr %s203, 2
        %s205 = smul.addr %s204, 4
        %s206 = scalar_lea.vmem %s0, %s205
        %p207 = pneg %p41
        %p208 = pneg %p38
        %p209 = pneg %p62
        %p210 = pneg %p59
        %p211 = pneg %p83
        %p212 = pneg %p80
        %p213 = pneg %p104
        %p214 = pneg %p101
        %p215 = pneg %p130
        %p216 = pneg %p127
        %s217 = sand.u32 %s117, 1
        %s218 = scalar_lea.sflag [#allocation3], %s217
        %s219 = sand.u32 %s117, 1
        %s220 = smul.addr %s219, 128
        %s221 = scalar_lea.vmem [#allocation2], %s220
        %p222 = pneg %p156
        %p223 = pneg %p153
        %p224 = scmp.lt.s32.totalorder %s20, 1
        %s225 = scalar_select %p224, %s20, 1
        %s226 = smul.addr %s225, 2
        %s227 = scalar_lea.vmem %s5, %s226
        %s228 = smul.u32 16, %s20
        %p229 = scmp.lt.s32.totalorder %s228, 31
        %s230 = scalar_select %p229, %s228, 31
        %s231 = smul.addr %s230, 2
        %s232 = smul.addr %s231, 4
        %s233 = scalar_lea.vmem %s0, %s232
        %s234 = smul.u32 16, %s20
        %s235 = smul.u32 16, %s20
        %p236 = scmp.lt.s32.totalorder %s20, 1
        %s237 = scalar_select %p236, %s20, 1
        %s238 = smul.addr %s237, 2
        %s239 = scalar_lea.vmem %s5, %s238
        %v241 = vld [vmem:[%s233] sm:$0xff]
        %v242 = vld [vmem:[%s233 + $0x8] sm:$0xff]
        %v243 = vld [vmem:[%s233 + $0x10] sm:$0xff]
        %v244 = vld [vmem:[%s233 + $0x18] sm:$0xff]
        %v245 = vld [vmem:[%s233 + $0x20] sm:$0xff]
        %v246 = vld [vmem:[%s233 + $0x28] sm:$0xff]
        %v247 = vld [vmem:[%s233 + $0x30] sm:$0xff]
        %v248 = vld [vmem:[%s233 + $0x38] sm:$0xff]
        %v249 = vld [vmem:[%s233 + $0x40] sm:$0xff]
        %v250 = vld [vmem:[%s233 + $0x48] sm:$0xff]
        %v251 = vld [vmem:[%s233 + $0x50] sm:$0xff]
        %v252 = vld [vmem:[%s233 + $0x58] sm:$0xff]
        %v253 = vld [vmem:[%s233 + $0x60] sm:$0xff]
        %v254 = vld [vmem:[%s233 + $0x68] sm:$0xff]
        %v255 = vld [vmem:[%s233 + $0x70] sm:$0xff]
        %v256 = vld [vmem:[%s233 + $0x78] sm:$0xff]
        %v257 = vld [vmem:[%s1] sm:$0xf]
        %v258 = vld [vmem:[%s1 + $0x4] sm:$0xf]
        %v259 = vld [vmem:[%s1 + $0x8] sm:$0xf]
        %v260 = vld [vmem:[%s1 + $0xc] sm:$0xf]
        %v261 = vld [vmem:[%s1 + $0x10] sm:$0xf]
        %v262 = vld [vmem:[%s1 + $0x14] sm:$0xf]
        %v263 = vld [vmem:[%s1 + $0x18] sm:$0xf]
        %v264 = vld [vmem:[%s1 + $0x1c] sm:$0xf]
        %v265 = vld [vmem:[%s1 + $0x20] sm:$0xf]
        %v266 = vld [vmem:[%s1 + $0x24] sm:$0xf]
        %v267 = vld [vmem:[%s1 + $0x28] sm:$0xf]
        %v268 = vld [vmem:[%s1 + $0x2c] sm:$0xf]
        %v269 = vld [vmem:[%s1 + $0x30] sm:$0xf]
        %v270 = vld [vmem:[%s1 + $0x34] sm:$0xf]
        %v271 = vld [vmem:[%s1 + $0x38] sm:$0xf]
        %v272 = vld [vmem:[%s1 + $0x3c] sm:$0xf]
        %v273 = vld [vmem:[%s1 + $0x40] sm:$0xf]
        %v274 = vld [vmem:[%s1 + $0x44] sm:$0xf]
        %v275 = vld [vmem:[%s1 + $0x48] sm:$0xf]
        %v276 = vld [vmem:[%s1 + $0x4c] sm:$0xf]
        %v277 = vld [vmem:[%s1 + $0x50] sm:$0xf]
        %v278 = vld [vmem:[%s1 + $0x54] sm:$0xf]
        %v279 = vld [vmem:[%s1 + $0x58] sm:$0xf]
        %v280 = vld [vmem:[%s1 + $0x5c] sm:$0xf]
        %v281 = vld [vmem:[%s1 + $0x60] sm:$0xf]
        %v282 = vld [vmem:[%s1 + $0x64] sm:$0xf]
        %v283 = vld [vmem:[%s1 + $0x68] sm:$0xf]
        %v284 = vld [vmem:[%s1 + $0x6c] sm:$0xf]
        %v285 = vld [vmem:[%s1 + $0x70] sm:$0xf]
        %v286 = vld [vmem:[%s1 + $0x74] sm:$0xf]
        %v287 = vld [vmem:[%s1 + $0x78] sm:$0xf]
        %v288 = vld [vmem:[%s1 + $0x7c] sm:$0xf]
        %v289 = vld [vmem:[%s2] sm:$0x1]
        %v291 = vlaneseq
        %v292 = vshrl.u32 %v291, 7
        %v293 = vsub.s32 0, %v292
        %v294 = vrot.slane %v289, %v293
        %v312 = vunpack.c.l.b16 %v241
        %v313 = vunpack.c.h.b16 %v241
        %v314 = vunpack.c.l.b16 %v242
        %v315 = vunpack.c.h.b16 %v242
        %v316 = vunpack.c.l.b16 %v243
        %v317 = vunpack.c.h.b16 %v243
        %v318 = vunpack.c.l.b16 %v244
        %v319 = vunpack.c.h.b16 %v244
        %v320 = vunpack.c.l.b16 %v245
        %v321 = vunpack.c.h.b16 %v245
        %v322 = vunpack.c.l.b16 %v246
        %v323 = vunpack.c.h.b16 %v246
        %v324 = vunpack.c.l.b16 %v247
        %v325 = vunpack.c.h.b16 %v247
        %v326 = vunpack.c.l.b16 %v248
        %v327 = vunpack.c.h.b16 %v248
        %v328 = vunpack.c.l.b16 %v249
        %v329 = vunpack.c.h.b16 %v249
        %v330 = vunpack.c.l.b16 %v250
        %v331 = vunpack.c.h.b16 %v250
        %v332 = vunpack.c.l.b16 %v251
        %v333 = vunpack.c.h.b16 %v251
        %v334 = vunpack.c.l.b16 %v252
        %v335 = vunpack.c.h.b16 %v252
        %v336 = vunpack.c.l.b16 %v253
        %v337 = vunpack.c.h.b16 %v253
        %v338 = vunpack.c.l.b16 %v254
        %v339 = vunpack.c.h.b16 %v254
        %v340 = vunpack.c.l.b16 %v255
        %v341 = vunpack.c.h.b16 %v255
        %v342 = vunpack.c.l.b16 %v256
        %v343 = vunpack.c.h.b16 %v256
        %v344 = vpack.c.b16 %v314, %v312
        %v345 = vpack.c.b16 %v315, %v313
        %v346 = vpack.c.b16 %v318, %v316
        %v347 = vpack.c.b16 %v319, %v317
        %v348 = vpack.c.b16 %v322, %v320
        %v349 = vpack.c.b16 %v323, %v321
        %v350 = vpack.c.b16 %v326, %v324
        %v351 = vpack.c.b16 %v327, %v325
        %v352 = vpack.c.b16 %v330, %v328
        %v353 = vpack.c.b16 %v331, %v329
        %v354 = vpack.c.b16 %v334, %v332
        %v355 = vpack.c.b16 %v335, %v333
        %v356 = vpack.c.b16 %v338, %v336
        %v357 = vpack.c.b16 %v339, %v337
        %v358 = vpack.c.b16 %v342, %v340
        %v359 = vpack.c.b16 %v343, %v341
        %v408 = vunpack.c.l.b16 %v257
        %v409 = vunpack.c.l.b16 %v258
        %v410 = vunpack.c.l.b16 %v259
        %v411 = vunpack.c.l.b16 %v260
        %v412 = vunpack.c.l.b16 %v261
        %v413 = vunpack.c.l.b16 %v262
        %v414 = vunpack.c.l.b16 %v263
        %v415 = vunpack.c.l.b16 %v264
        %v416 = vunpack.c.l.b16 %v265
        %v417 = vunpack.c.l.b16 %v266
        %v418 = vunpack.c.l.b16 %v267
        %v419 = vunpack.c.l.b16 %v268
        %v420 = vunpack.c.l.b16 %v269
        %v421 = vunpack.c.l.b16 %v270
        %v422 = vunpack.c.l.b16 %v271
        %v423 = vunpack.c.l.b16 %v272
        %v424 = vunpack.c.l.b16 %v273
        %v425 = vunpack.c.l.b16 %v274
        %v426 = vunpack.c.l.b16 %v275
        %v427 = vunpack.c.l.b16 %v276
        %v428 = vunpack.c.l.b16 %v277
        %v429 = vunpack.c.l.b16 %v278
        %v430 = vunpack.c.l.b16 %v279
        %v431 = vunpack.c.l.b16 %v280
        %v432 = vunpack.c.l.b16 %v281
        %v433 = vunpack.c.l.b16 %v282
        %v434 = vunpack.c.l.b16 %v283
        %v435 = vunpack.c.l.b16 %v284
        %v436 = vunpack.c.l.b16 %v285
        %v437 = vunpack.c.l.b16 %v286
        %v438 = vunpack.c.l.b16 %v287
        %v439 = vunpack.c.l.b16 %v288
        %v440 = vpack.c.b16 %v409, %v408
        %v441 = vpack.c.b16 %v411, %v410
        %v442 = vpack.c.b16 %v413, %v412
        %v443 = vpack.c.b16 %v415, %v414
        %v444 = vpack.c.b16 %v417, %v416
        %v445 = vpack.c.b16 %v419, %v418
        %v446 = vpack.c.b16 %v421, %v420
        %v447 = vpack.c.b16 %v423, %v422
        %v448 = vpack.c.b16 %v425, %v424
        %v449 = vpack.c.b16 %v427, %v426
        %v450 = vpack.c.b16 %v429, %v428
        %v451 = vpack.c.b16 %v431, %v430
        %v452 = vpack.c.b16 %v433, %v432
        %v453 = vpack.c.b16 %v435, %v434
        %v454 = vpack.c.b16 %v437, %v436
        %v455 = vpack.c.b16 %v439, %v438
        %472 = vmatprep.subr.bf16.mxu0 0
        %473 = vmatpush1.bf16.msra.mxu0 %v440
        %474 = vmatprep.subr.bf16.mxu0 0
        %475 = vmatpush1.bf16.msra.mxu0 %v441
        %476 = vmatprep.subr.bf16.mxu0 0
        %477 = vmatpush1.bf16.msra.mxu0 %v442
        %478 = vmatprep.subr.bf16.mxu0 0
        %479 = vmatpush1.bf16.msra.mxu0 %v443
        %480 = vmatprep.subr.bf16.mxu0 0
        %481 = vmatpush1.bf16.msra.mxu0 %v444
        %482 = vmatprep.subr.bf16.mxu0 0
        %483 = vmatpush1.bf16.msra.mxu0 %v445
        %484 = vmatprep.subr.bf16.mxu0 0
        %485 = vmatpush1.bf16.msra.mxu0 %v446
        %486 = vmatprep.subr.bf16.mxu0 0
        %487 = vmatpush1.bf16.msra.mxu0 %v447
        %488 = vmatprep.subr.bf16.mxu0 0
        %489 = vmatpush1.bf16.msra.mxu0 %v448
        %490 = vmatprep.subr.bf16.mxu0 0
        %491 = vmatpush1.bf16.msra.mxu0 %v449
        %492 = vmatprep.subr.bf16.mxu0 0
        %493 = vmatpush1.bf16.msra.mxu0 %v450
        %494 = vmatprep.subr.bf16.mxu0 0
        %495 = vmatpush1.bf16.msra.mxu0 %v451
        %496 = vmatprep.subr.bf16.mxu0 0
        %497 = vmatpush1.bf16.msra.mxu0 %v452
        %498 = vmatprep.subr.bf16.mxu0 0
        %499 = vmatpush1.bf16.msra.mxu0 %v453
        %500 = vmatprep.subr.bf16.mxu0 0
        %501 = vmatpush1.bf16.msra.mxu0 %v454
        %502 = vmatprep.subr.bf16.mxu0 0
        %503 = vmatpush1.bf16.msra.mxu0 %v455
        %504 = vmatprep.mubr.bf16.mxu0 %v345
        %505 = vmatmul.mubr.bf16.gmra.mrb[0].mxu0 %v344
        %v506 = vpop.f32.mrb[0].mxu0
        %v507 = vadd.f32 %v294, %v506
        %v508 = vpop.f32.mrb[0].mxu0
        %v509 = vpop.f32.mrb[0].mxu0
        %v510 = vadd.f32 %v294, %v509
        %v511 = vpop.f32.mrb[0].mxu0
        %512 = vmatprep.mubr.bf16.mxu0 %v347
        %513 = vmatmul.mubr.bf16.gmra.mrb[0].mxu0 %v346
        %v514 = vpop.f32.mrb[0].mxu0
        %v515 = vadd.f32 %v294, %v514
        %v516 = vpop.f32.mrb[0].mxu0
        %v517 = vpop.f32.mrb[0].mxu0
        %v518 = vadd.f32 %v294, %v517
        %v519 = vpop.f32.mrb[0].mxu0
        %520 = vmatprep.mubr.bf16.mxu0 %v349
        %521 = vmatmul.mubr.bf16.gmra.mrb[0].mxu0 %v348
        %v522 = vpop.f32.mrb[0].mxu0
        %v523 = vadd.f32 %v294, %v522
        %v524 = vpop.f32.mrb[0].mxu0
        %v525 = vpop.f32.mrb[0].mxu0
        %v526 = vadd.f32 %v294, %v525
        %v527 = vpop.f32.mrb[0].mxu0
        %528 = vmatprep.mubr.bf16.mxu0 %v351
        %529 = vmatmul.mubr.bf16.gmra.mrb[0].mxu0 %v350
        %v530 = vpop.f32.mrb[0].mxu0
        %v531 = vadd.f32 %v294, %v530
        %v532 = vpop.f32.mrb[0].mxu0
        %v533 = vpop.f32.mrb[0].mxu0
        %v534 = vadd.f32 %v294, %v533
        %v535 = vpop.f32.mrb[0].mxu0
        %536 = vmatprep.mubr.bf16.mxu0 %v353
        %537 = vmatmul.mubr.bf16.gmra.mrb[0].mxu0 %v352
        %v538 = vpop.f32.mrb[0].mxu0
        %v539 = vadd.f32 %v294, %v538
        %v540 = vpop.f32.mrb[0].mxu0
        %v541 = vpop.f32.mrb[0].mxu0
        %v542 = vadd.f32 %v294, %v541
        %v543 = vpop.f32.mrb[0].mxu0
        %544 = vmatprep.mubr.bf16.mxu0 %v355
        %545 = vmatmul.mubr.bf16.gmra.mrb[0].mxu0 %v354
        %v546 = vpop.f32.mrb[0].mxu0
        %v547 = vadd.f32 %v294, %v546
        %v548 = vpop.f32.mrb[0].mxu0
        %v549 = vpop.f32.mrb[0].mxu0
        %v550 = vadd.f32 %v294, %v549
        %v551 = vpop.f32.mrb[0].mxu0
        %552 = vmatprep.mubr.bf16.mxu0 %v357
        %553 = vmatmul.mubr.bf16.gmra.mrb[0].mxu0 %v356
        %v554 = vpop.f32.mrb[0].mxu0
        %v555 = vadd.f32 %v294, %v554
        %v556 = vpop.f32.mrb[0].mxu0
        %v557 = vpop.f32.mrb[0].mxu0
        %v558 = vadd.f32 %v294, %v557
        %v559 = vpop.f32.mrb[0].mxu0
        %560 = vmatprep.mubr.bf16.mxu0 %v359
        %561 = vmatmul.mubr.bf16.gmra.mrb[0].mxu0 %v358
        %v562 = vpop.f32.mrb[0].mxu0
        %v563 = vadd.f32 %v294, %v562
        %v564 = vpop.f32.mrb[0].mxu0
        %v565 = vpop.f32.mrb[0].mxu0
        %v566 = vadd.f32 %v294, %v565
        %v567 = vpop.f32.mrb[0].mxu0
        %568 = vdwg.mxu0
        %v569 = vmax.f32 %v507, 0.0
        %v570 = vmax.f32 %v510, 0.0
        %v571 = vmax.f32 %v515, 0.0
        %v572 = vmax.f32 %v518, 0.0
        %v573 = vmax.f32 %v523, 0.0
        %v574 = vmax.f32 %v526, 0.0
        %v575 = vmax.f32 %v531, 0.0
        %v576 = vmax.f32 %v534, 0.0
        %v577 = vmax.f32 %v539, 0.0
        %v578 = vmax.f32 %v542, 0.0
        %v579 = vmax.f32 %v547, 0.0
        %v580 = vmax.f32 %v550, 0.0
        %v581 = vmax.f32 %v555, 0.0
        %v582 = vmax.f32 %v558, 0.0
        %v583 = vmax.f32 %v563, 0.0
        %v584 = vmax.f32 %v566, 0.0
        %585 = vst [vmem:[%s221] sm:$0xff] %v569
        %586 = vst [vmem:[%s221 + $0x8] sm:$0xff] %v570
        %587 = vst [vmem:[%s221 + $0x10] sm:$0xff] %v571
        %588 = vst [vmem:[%s221 + $0x18] sm:$0xff] %v572
        %589 = vst [vmem:[%s221 + $0x20] sm:$0xff] %v573
        %590 = vst [vmem:[%s221 + $0x28] sm:$0xff] %v574
        %591 = vst [vmem:[%s221 + $0x30] sm:$0xff] %v575
        %592 = vst [vmem:[%s221 + $0x38] sm:$0xff] %v576
        %593 = vst [vmem:[%s221 + $0x40] sm:$0xff] %v577
        %594 = vst [vmem:[%s221 + $0x48] sm:$0xff] %v578
        %595 = vst [vmem:[%s221 + $0x50] sm:$0xff] %v579
        %596 = vst [vmem:[%s221 + $0x58] sm:$0xff] %v580
        %597 = vst [vmem:[%s221 + $0x60] sm:$0xff] %v581
        %598 = vst [vmem:[%s221 + $0x68] sm:$0xff] %v582
        %599 = vst [vmem:[%s221 + $0x70] sm:$0xff] %v583
        %600 = vst [vmem:[%s221 + $0x78] sm:$0xff] %v584
        %v601 = vld [vmem:[%s3] sm:$0x3]
        %602 = vmatprep.subr.mxu0 0.0
        %603 = vmatpush1.xpose.msra.mxu0 %v569
        %604 = vmatprep.subr.mxu0 0.0
        %605 = vmatpush1.xpose.msra.mxu0 %v570
        %606 = vmatprep.subr.mxu0 0.0
        %607 = vmatpush1.xpose.msra.mxu0 %v571
        %608 = vmatprep.subr.mxu0 0.0
        %609 = vmatpush1.xpose.msra.mxu0 %v572
        %610 = vmatprep.subr.mxu0 0.0
        %611 = vmatpush1.xpose.msra.mxu0 %v573
        %612 = vmatprep.subr.mxu0 0.0
        %613 = vmatpush1.xpose.msra.mxu0 %v574
        %614 = vmatprep.subr.mxu0 0.0
        %615 = vmatpush1.xpose.msra.mxu0 %v575
        %616 = vmatprep.subr.mxu0 0.0
        %617 = vmatpush1.xpose.msra.mxu0 %v576
        %618 = vmatprep.subr.mxu0 0.0
        %619 = vmatpush1.xpose.msra.mxu0 %v577
        %620 = vmatprep.subr.mxu0 0.0
        %621 = vmatpush1.xpose.msra.mxu0 %v578
        %622 = vmatprep.subr.mxu0 0.0
        %623 = vmatpush1.xpose.msra.mxu0 %v579
        %624 = vmatprep.subr.mxu0 0.0
        %625 = vmatpush1.xpose.msra.mxu0 %v580
        %626 = vmatprep.subr.mxu0 0.0
        %627 = vmatpush1.xpose.msra.mxu0 %v581
        %628 = vmatprep.subr.mxu0 0.0
        %629 = vmatpush1.xpose.msra.mxu0 %v582
        %630 = vmatprep.subr.mxu0 0.0
        %631 = vmatpush1.xpose.msra.mxu0 %v583
        %632 = vmatprep.subr.mxu0 0.0
        %633 = vmatpush1.xpose.msra.mxu0 %v584
        %634 = vmatprep.subr.mxu0 0.0
        %635 = vmatpush1.xpose.msra.mxu0 0.0
        %636 = vmatprep.subr.mxu0 0.0
        %637 = vmatpush1.xpose.msra.mxu0 0.0
        %638 = vmatprep.subr.mxu0 0.0
        %639 = vmatpush1.xpose.msra.mxu0 0.0
        %640 = vmatprep.subr.mxu0 0.0
        %641 = vmatpush1.xpose.msra.mxu0 0.0
        %642 = vmatprep.subr.mxu0 0.0
        %643 = vmatpush1.xpose.msra.mxu0 0.0
        %644 = vmatprep.subr.mxu0 0.0
        %645 = vmatpush1.xpose.msra.mxu0 0.0
        %646 = vmatprep.subr.mxu0 0.0
        %647 = vmatpush1.xpose.msra.mxu0 0.0
        %648 = vmatprep.subr.mxu0 0.0
        %649 = vmatpush1.xpose.msra.mxu0 0.0
        %650 = vmatprep.subr.mxu0 0.0
        %651 = vmatpush1.xpose.msra.mxu0 0.0
        %652 = vmatprep.subr.mxu0 0.0
        %653 = vmatpush1.xpose.msra.mxu0 0.0
        %654 = vmatprep.subr.mxu0 0.0
        %655 = vmatpush1.xpose.msra.mxu0 0.0
        %656 = vmatprep.subr.mxu0 0.0
        %657 = vmatpush1.xpose.msra.mxu0 0.0
        %658 = vmatprep.subr.mxu0 0.0
        %659 = vmatpush1.xpose.msra.mxu0 0.0
        %660 = vmatprep.subr.mxu0 0.0
        %661 = vmatpush1.xpose.msra.mxu0 0.0
        %662 = vmatprep.subr.mxu0 0.0
        %663 = vmatpush1.xpose.msra.mxu0 0.0
        %664 = vmatprep.subr.mxu0 0.0
        %665 = vmatpush1.xpose.msra.mxu0 0.0
        %666 = vmatprep.mubr.f32.mxu0 0.0
        %667 = vmatmul.mubr.f32.gmra.mrb[0].mxu0 %v601
        %v668 = vpop.f32.mrb[0].mxu0
        %v669 = vadd.f32 0.0, %v668
        %v670 = vpop.f32.mrb[0].mxu0
        %671 = vdwg.mxu0
        %672 = vst [vmem:[%s239] sm:$0x3] %v669
        %s673 = sand.u32 %s117, 1
        %s674 = scalar_lea.sflag [#allocation3], %s673
        %s675 = sand.u32 %s117, 1
        %s676 = smul.addr %s675, 128
        %s677 = scalar_lea.vmem [#allocation2], %s676
        %p678 = scmp.lt.s32.totalorder %s20, 1
        %s679 = scalar_select %p678, %s20, 1
        %s680 = smul.addr %s679, 2
        %s681 = scalar_lea.vmem %s5, %s680
        // Predicated region
        $region37: #{gcne_forward.6} parent=35 // pred_check
          %p682 = pneg %p127
        $region38: #{gcne_forward.6} parent=35 // pred_check_branch
          %684 = sbr.rel (%p682) target = $region40
        $region39: #{gcne_forward.6} parent=35 // pred_region
          %s685 = smul.u32 16, %s20
          %s687 = ssub.s32 2048, 2048
          %688 = vsyncadd %s674, %s687
          %s689 = smul.addr %s685, 128
          %s690 = scalar_lea.hbm %s4, %s689
          %s691 = sshll.u32 %s677, 4
          %s692 = int_to_ptr.vmem [resolvable:$true] %s691
          %697 = dma.vmem_to_hbm [thread:$0]  %s692, 2048, %s690, %s674, 128, 128, 8
        $region40: #{gcne_forward.6} parent=35 // pred_fallthru
          _
        // Predicated region
        $region41: #{gcne_forward.6} parent=35 // pred_check
          %p698 = pneg %p153
        $region42: #{gcne_forward.6} parent=35 // pred_check_branch
          %700 = sbr.rel (%p698) target = $region44
        $region43: #{gcne_forward.6} parent=35 // pred_region
          _
        $region44: #{gcne_forward.6} parent=35 // pred_fallthru
          _
      $region36: #{gcne_forward.6} parent=5 // pred_fallthru
        _
      %p701 = scmp.le.s32.totalorder 2, %s15
      // Predicated region
      $region45: #{gcne_forward.6} parent=5 // pred_check
        %p702 = pneg %p701
      $region46: #{gcne_forward.6} parent=5 // pred_check_branch
        %704 = sbr.rel (%p702) target = $region48
      $region47: #{gcne_forward.6} parent=5 // pred_region
        %s705 = ssub.s32 %s15, 2
        // Predicated region
        $region49: #{gcne_forward.6} parent=47 // pred_check
          %p706 = pneg %p133
        $region50: #{gcne_forward.6} parent=47 // pred_check_branch
          %708 = sbr.rel (%p706) target = $region52
        $region51: #{gcne_forward.6} parent=47 // pred_region
          %s709 = sand.u32 %s118, 1
          %s710 = scalar_lea.sflag [#allocation3], %s709
          %s711 = sand.u32 %s118, 1
          %s712 = smul.addr %s711, 128
          %s713 = scalar_lea.vmem [#allocation2], %s712
          %714 = dma.done %s710, 2048
        $region52: #{gcne_forward.6} parent=47 // pred_fallthru
          _
        // Predicated region
        $region53: #{gcne_forward.6} parent=47 // pred_check
          %p715 = pneg %p159
        $region54: #{gcne_forward.6} parent=47 // pred_check_branch
          %717 = sbr.rel (%p715) target = $region56
        $region55: #{gcne_forward.6} parent=47 // pred_region
          %p718 = scmp.lt.s32.totalorder %s21, 1
          %s719 = scalar_select %p718, %s21, 1
          %s720 = smul.addr %s719, 2
          %s721 = scalar_lea.vmem %s5, %s720
        $region56: #{gcne_forward.6} parent=47 // pred_fallthru
          _
      $region48: #{gcne_forward.6} parent=5 // pred_fallthru
        _
    $region6: #{gcne_forward.6} parent=1 // loop_footer
      %s19 = sadd.s32 1, %s15
    $region7: #{gcne_forward.6} parent=1 // loop_footer_branch
      %14 = sbr.rel target = $region3
    $region8: #{gcne_forward.6} parent=1 // loop_exit
      _
    %722 = vsyncpa [#allocation3], 1
    %s723 = scalar_lea.sflag [#allocation3], 1
    %724 = vsyncpa %s723, 1

// kernel: gcne_forward.7
$region0: #{gcne_forward.7}
  #allocation0 [shape = 'u32[]', space=smem, size = 0x4, offset = 0x4, fixed_abs, tag = 'smem constant byte address 0x4 - core index']
  #allocation1 [shape = 'u32[144,128]{1,0:T(1,128)}', space=vmem, size = 0x12000, scoped, tag = 'internal scratch']
  #allocation2 [shape = 'f32[2,32]{1,0:T(2,128)}', space=vmem, size = 0x400, scoped, tag = 'scratch operand']
  %s0 = inlined_call_operand.vmem [shape: f32[2,256], index: 0, kind: input, shape index: {}]
  %s1 = inlined_call_operand.vmem [shape: f32[256,32], index: 1, kind: input, shape index: {}]
  %s2 = inlined_call_operand.vmem [shape: f32[1,32], index: 2, kind: input, shape index: {}]
  %s3 = inlined_call_operand.vmem [shape: f32[32,3], index: 3, kind: input, shape index: {}]
  %s4 = inlined_call_operand.vmem [shape: f32[1,3], index: 4, kind: input, shape index: {}]
  %s5 = inlined_call_operand.hbm [shape: f32[2,3], index: 5, kind: output, shape index: {}]
  %s6 = sld [smem:[#allocation0]]
  $region61: #{gcne_forward.7} parent=0
    _
  %s8 = ssub.s32 1, %s6
  %s9 = scalar_select 0, %s8, %s6
  $region1: #{gcne_forward.7} parent=0
    #allocation3 [shape = 'u8[1024]{0}', space=vmem, size = 0x400, scoped, tag = 'output window, operand 0, single buffered']
    #allocation4 [shape = 's32[2]{0}', space=sflag, size = 0x8, scoped, tag = 'scoped memory for gcne_forward.7']
    %10 = vsyncpa [#allocation4], 0
    loop: start=0, step=1, limit=4
    $region2: #{gcne_forward.7} parent=1 // loop_pre_header
      _
    $region3: #{gcne_forward.7} parent=1 // loop_header
      %s12 = sphi 0, %s16
      %p13 = scmp.ge.s32.totalorder %s12, 4
      %s22 = sphi 0, %s24
      %s25 = sphi 0, %s22
      %s26 = sphi 0, %s25
      %s42 = sphi 0, %s26
      %s48 = sphi 0, %s50
      %s51 = sphi 0, %s48
      %s52 = sphi 0, %s51
      %s68 = sphi 0, %s52
      %s72 = sphi 0, %s72
      %s74 = sphi 0, %s72
      %s75 = sphi 0, %s74
      %s89 = sphi 0, %s75
      %s93 = sphi 0, %s93
      %s95 = sphi 0, %s93
      %s96 = sphi 0, %s95
      %s110 = sphi 0, %s96
      %s114 = sphi 0, %s114
      %s116 = sphi 0, %s114
      %s117 = sphi 0, %s116
      %s131 = sphi 0, %s117
      %s135 = sphi 0, %s135
      %s137 = sphi 0, %s135
      %s138 = sphi 0, %s137
      %s152 = sphi 0, %s138
    $region4: #{gcne_forward.7} parent=1 // loop_header_branch
      %15 = sbr.rel (%p13) target = $region8
    $region5: #{gcne_forward.7} parent=1 // loop_body
      %s17 = ssub.s32 %s12, 1
      %s18 = ssub.s32 %s12, 2
      %s19 = sadd.s32 %s12, 1
      %s20 = ssub.s32 %s12, %s19
      %p21 = scmp.eq.s32.totalorder %s20, 0
      %s23 = sadd.s32 %s22, 1
      %s24 = scalar_select %p21, %s22, %s23
      %p27 = pneg %p21
      %p28 = scmp.eq.s32.totalorder %s12, 1
      %p29 = por %p27, %p28
      %p30 = scmp.ne.s32.totalorder %s22, %s25
      %p31 = scmp.eq.s32.totalorder %s12, 0
      %p32 = por %p30, %p31
      %p33 = scmp.ne.s32.totalorder %s22, %s25
      %p34 = scmp.eq.s32.totalorder %s17, 1
      %p35 = por %p33, %p34
      %p36 = scmp.ne.s32.totalorder %s25, %s26
      %p37 = scmp.eq.s32.totalorder %s17, 0
      %p38 = por %p36, %p37
      %p39 = scmp.ne.s32.totalorder %s25, %s26
      %p40 = scmp.eq.s32.totalorder %s18, 1
      %p41 = por %p39, %p40
      %p43 = scmp.ne.s32.totalorder %s26, %s42
      %p44 = scmp.eq.s32.totalorder %s18, 0
      %p45 = por %p43, %p44
      %s46 = ssub.s32 %s12, %s19
      %p47 = scmp.eq.s32.totalorder %s46, 0
      %s49 = sadd.s32 %s48, 1
      %s50 = scalar_select %p47, %s48, %s49
      %p53 = pneg %p47
      %p54 = scmp.eq.s32.totalorder %s12, 1
      %p55 = por %p53, %p54
      %p56 = scmp.ne.s32.totalorder %s48, %s51
      %p57 = scmp.eq.s32.totalorder %s12, 0
      %p58 = por %p56, %p57
      %p59 = scmp.ne.s32.totalorder %s48, %s51
      %p60 = scmp.eq.s32.totalorder %s17, 1
      %p61 = por %p59, %p60
      %p62 = scmp.ne.s32.totalorder %s51, %s52
      %p63 = scmp.eq.s32.totalorder %s17, 0
      %p64 = por %p62, %p63
      %p65 = scmp.ne.s32.totalorder %s51, %s52
      %p66 = scmp.eq.s32.totalorder %s18, 1
      %p67 = por %p65, %p66
      %p69 = scmp.ne.s32.totalorder %s52, %s68
      %p70 = scmp.eq.s32.totalorder %s18, 0
      %p71 = por %p69, %p70
      %s73 = sadd.s32 %s72, 1
      %p76 = scmp.eq.s32.totalorder %s12, 1
      %p77 = scmp.ne.s32.totalorder %s72, %s74
      %p78 = scmp.eq.s32.totalorder %s12, 0
      %p79 = por %p77, %p78
      %p80 = scmp.ne.s32.totalorder %s72, %s74
      %p81 = scmp.eq.s32.totalorder %s17, 1
      %p82 = por %p80, %p81
      %p83 = scmp.ne.s32.totalorder %s74, %s75
      %p84 = scmp.eq.s32.totalorder %s17, 0
      %p85 = por %p83, %p84
      %p86 = scmp.ne.s32.totalorder %s74, %s75
      %p87 = scmp.eq.s32.totalorder %s18, 1
      %p88 = por %p86, %p87
      %p90 = scmp.ne.s32.totalorder %s75, %s89
      %p91 = scmp.eq.s32.totalorder %s18, 0
      %p92 = por %p90, %p91
      %s94 = sadd.s32 %s93, 1
      %p97 = scmp.eq.s32.totalorder %s12, 1
      %p98 = scmp.ne.s32.totalorder %s93, %s95
      %p99 = scmp.eq.s32.totalorder %s12, 0
      %p100 = por %p98, %p99
      %p101 = scmp.ne.s32.totalorder %s93, %s95
      %p102 = scmp.eq.s32.totalorder %s17, 1
      %p103 = por %p101, %p102
      %p104 = scmp.ne.s32.totalorder %s95, %s96
      %p105 = scmp.eq.s32.totalorder %s17, 0
      %p106 = por %p104, %p105
      %p107 = scmp.ne.s32.totalorder %s95, %s96
      %p108 = scmp.eq.s32.totalorder %s18, 1
      %p109 = por %p107, %p108
      %p111 = scmp.ne.s32.totalorder %s96, %s110
      %p112 = scmp.eq.s32.totalorder %s18, 0
      %p113 = por %p111, %p112
      %s115 = sadd.s32 %s114, 1
      %p118 = scmp.eq.s32.totalorder %s12, 1
      %p119 = scmp.ne.s32.totalorder %s114, %s116
      %p120 = scmp.eq.s32.totalorder %s12, 0
      %p121 = por %p119, %p120
      %p122 = scmp.ne.s32.totalorder %s114, %s116
      %p123 = scmp.eq.s32.totalorder %s17, 1
      %p124 = por %p122, %p123
      %p125 = scmp.ne.s32.totalorder %s116, %s117
      %p126 = scmp.eq.s32.totalorder %s17, 0
      %p127 = por %p125, %p126
      %p128 = scmp.ne.s32.totalorder %s116, %s117
      %p129 = scmp.eq.s32.totalorder %s18, 1
      %p130 = por %p128, %p129
      %p132 = scmp.ne.s32.totalorder %s117, %s131
      %p133 = scmp.eq.s32.totalorder %s18, 0
      %p134 = por %p132, %p133
      %s136 = sadd.s32 %s135, 1
      %p139 = scmp.eq.s32.totalorder %s12, 1
      %p140 = scmp.ne.s32.totalorder %s135, %s137
      %p141 = scmp.eq.s32.totalorder %s12, 0
      %p142 = por %p140, %p141
      %p143 = scmp.ne.s32.totalorder %s135, %s137
      %p144 = scmp.eq.s32.totalorder %s17, 1
      %p145 = por %p143, %p144
      %p146 = scmp.ne.s32.totalorder %s137, %s138
      %p147 = scmp.eq.s32.totalorder %s17, 0
      %p148 = por %p146, %p147
      %p149 = scmp.ne.s32.totalorder %s137, %s138
      %p150 = scmp.eq.s32.totalorder %s18, 1
      %p151 = por %p149, %p150
      %p153 = scmp.ne.s32.totalorder %s138, %s152
      %p154 = scmp.eq.s32.totalorder %s18, 0
      %p155 = por %p153, %p154
      %p156 = scmp.le.s32.totalorder 1, %s12
      %p157 = scmp.lt.s32.totalorder %s12, 3
      %p158 = pnand %p156, %p157
      %p159 = pneg %p158
      // Predicated region
      $region9: #{gcne_forward.7} parent=5 // pred_check
        _
      $region10: #{gcne_forward.7} parent=5 // pred_check_branch
        %161 = sbr.rel (%p158) target = $region12
      $region11: #{gcne_forward.7} parent=5 // pred_region
        %s162 = ssub.s32 %s12, 1
        // Predicated region
        $region13: #{gcne_forward.7} parent=11 // pred_check
          %p163 = pneg %p85
        $region14: #{gcne_forward.7} parent=11 // pred_check_branch
          %165 = sbr.rel (%p163) target = $region16
        $region15: #{gcne_forward.7} parent=11 // pred_region
          _
        $region16: #{gcne_forward.7} parent=11 // pred_fallthru
          _
        // Predicated region
        $region17: #{gcne_forward.7} parent=11 // pred_check
          %p166 = pneg %p106
        $region18: #{gcne_forward.7} parent=11 // pred_check_branch
          %168 = sbr.rel (%p166) target = $region20
        $region19: #{gcne_forward.7} parent=11 // pred_region
          _
        $region20: #{gcne_forward.7} parent=11 // pred_fallthru
          _
        // Predicated region
        $region21: #{gcne_forward.7} parent=11 // pred_check
          %p169 = pneg %p127
        $region22: #{gcne_forward.7} parent=11 // pred_check_branch
          %171 = sbr.rel (%p169) target = $region24
        $region23: #{gcne_forward.7} parent=11 // pred_region
          _
        $region24: #{gcne_forward.7} parent=11 // pred_fallthru
          _
      $region12: #{gcne_forward.7} parent=5 // pred_fallthru
        _
      %p172 = scmp.lt.s32.totalorder %s12, 2
      // Predicated region
      $region25: #{gcne_forward.7} parent=5 // pred_check
        %p173 = pneg %p172
      $region26: #{gcne_forward.7} parent=5 // pred_check_branch
        %175 = sbr.rel (%p173) target = $region28
      $region27: #{gcne_forward.7} parent=5 // pred_region
        // Predicated region
        $region29: #{gcne_forward.7} parent=27 // pred_check
          %p176 = pneg %p32
        $region30: #{gcne_forward.7} parent=27 // pred_check_branch
          %178 = sbr.rel (%p176) target = $region32
        $region31: #{gcne_forward.7} parent=27 // pred_region
          %p179 = scmp.lt.s32.totalorder %s12, 1
          %s180 = scalar_select %p179, %s12, 1
          %s181 = smul.addr %s180, 2
          %s182 = scalar_lea.vmem %s0, %s181
        $region32: #{gcne_forward.7} parent=27 // pred_fallthru
          _
        // Predicated region
        $region33: #{gcne_forward.7} parent=27 // pred_check
          %p183 = pneg %p58
        $region34: #{gcne_forward.7} parent=27 // pred_check_branch
          %185 = sbr.rel (%p183) target = $region36
        $region35: #{gcne_forward.7} parent=27 // pred_region
          %s186 = smul.u32 16, %s12
          %p187 = scmp.lt.s32.totalorder %s186, 31
          %s188 = scalar_select %p187, %s186, 31
          %s189 = smul.addr %s188, 8
          %s190 = scalar_lea.vmem %s1, %s189
          %s191 = smul.u32 16, %s12
        $region36: #{gcne_forward.7} parent=27 // pred_fallthru
          _
      $region28: #{gcne_forward.7} parent=5 // pred_fallthru
        _
      %p192 = scmp.le.s32.totalorder 1, %s12
      %p193 = scmp.lt.s32.totalorder %s12, 3
      %p194 = pnand %p192, %p193
      %p195 = pneg %p194
      // Predicated region
      $region37: #{gcne_forward.7} parent=5 // pred_check
        _
      $region38: #{gcne_forward.7} parent=5 // pred_check_branch
        %197 = sbr.rel (%p194) target = $region40
      $region39: #{gcne_forward.7} parent=5 // pred_region
        %s198 = ssub.s32 %s12, 1
        %p199 = scmp.lt.s32.totalorder %s17, 1
        %s200 = scalar_select %p199, %s17, 1
        %s201 = smul.addr %s200, 2
        %s202 = scalar_lea.vmem %s0, %s201
        %p203 = pneg %p38
        %p204 = pneg %p35
        %s205 = smul.u32 16, %s17
        %p206 = scmp.lt.s32.totalorder %s205, 31
        %s207 = scalar_select %p206, %s205, 31
        %s208 = smul.addr %s207, 8
        %s209 = scalar_lea.vmem %s1, %s208
        %p210 = pneg %p64
        %p211 = pneg %p61
        %p212 = pneg %p85
        %p213 = pneg %p82
        %p214 = pneg %p106
        %p215 = pneg %p103
        %p216 = pneg %p127
        %p217 = pneg %p124
        %p218 = pneg %p148
        %p219 = pneg %p145
        %p220 = scmp.lt.s32.totalorder %s17, 1
        %s221 = scalar_select %p220, %s17, 1
        %s222 = smul.addr %s221, 2
        %s223 = scalar_lea.vmem %s0, %s222
        %s224 = smul.u32 16, %s17
        %p225 = scmp.lt.s32.totalorder %s224, 31
        %s226 = scalar_select %p225, %s224, 31
        %s227 = smul.addr %s226, 8
        %s228 = scalar_lea.vmem %s1, %s227
        %s229 = smul.u32 16, %s17
        %p230 = scmp.eq.s32.totalorder %s17, 0
        // Predicated region
        $region41: #{gcne_forward.7} parent=39 // pred_check
          %p231 = pneg %p230
        $region42: #{gcne_forward.7} parent=39 // pred_check_branch
          %233 = sbr.rel (%p231) target = $region44
        $region43: #{gcne_forward.7} parent=39 // pred_region
          %vm234 = vcmask 254976
          %235 = vst.msk [vmem:[#allocation2] sm:$0x3] %vm234, 0.0
        $region44: #{gcne_forward.7} parent=39 // pred_fallthru
          _
        %v236 = vld [vmem:[#allocation2] sm:$0x3]
        %v237 = vld [vmem:[%s223] sm:$0x3]
        %v238 = vld [vmem:[%s228] sm:$0xff]
        %v239 = vld [vmem:[%s228 + $0x8] sm:$0xff]
        %v240 = vld [vmem:[%s228 + $0x10] sm:$0xff]
        %v241 = vld [vmem:[%s228 + $0x18] sm:$0xff]
        %v242 = vld [vmem:[%s228 + $0x20] sm:$0xff]
        %v243 = vld [vmem:[%s228 + $0x28] sm:$0xff]
        %v244 = vld [vmem:[%s228 + $0x30] sm:$0xff]
        %v245 = vld [vmem:[%s228 + $0x38] sm:$0xff]
        %v246 = vld [vmem:[%s228 + $0x40] sm:$0xff]
        %v247 = vld [vmem:[%s228 + $0x48] sm:$0xff]
        %v248 = vld [vmem:[%s228 + $0x50] sm:$0xff]
        %v249 = vld [vmem:[%s228 + $0x58] sm:$0xff]
        %v250 = vld [vmem:[%s228 + $0x60] sm:$0xff]
        %v251 = vld [vmem:[%s228 + $0x68] sm:$0xff]
        %v252 = vld [vmem:[%s228 + $0x70] sm:$0xff]
        %v253 = vld [vmem:[%s228 + $0x78] sm:$0xff]
        %254 = vmatprep.subr.mxu0 0.0
        %255 = vmatpush1.msra.mxu0 %v238
        %256 = vmatprep.subr.mxu0 0.0
        %257 = vmatpush1.msra.mxu0 %v239
        %258 = vmatprep.subr.mxu0 0.0
        %259 = vmatpush1.msra.mxu0 %v240
        %260 = vmatprep.subr.mxu0 0.0
        %261 = vmatpush1.msra.mxu0 %v241
        %262 = vmatprep.subr.mxu0 0.0
        %263 = vmatpush1.msra.mxu0 %v242
        %264 = vmatprep.subr.mxu0 0.0
        %265 = vmatpush1.msra.mxu0 %v243
        %266 = vmatprep.subr.mxu0 0.0
        %267 = vmatpush1.msra.mxu0 %v244
        %268 = vmatprep.subr.mxu0 0.0
        %269 = vmatpush1.msra.mxu0 %v245
        %270 = vmatprep.subr.mxu0 0.0
        %271 = vmatpush1.msra.mxu0 %v246
        %272 = vmatprep.subr.mxu0 0.0
        %273 = vmatpush1.msra.mxu0 %v247
        %274 = vmatprep.subr.mxu0 0.0
        %275 = vmatpush1.msra.mxu0 %v248
        %276 = vmatprep.subr.mxu0 0.0
        %277 = vmatpush1.msra.mxu0 %v249
        %278 = vmatprep.subr.mxu0 0.0
        %279 = vmatpush1.msra.mxu0 %v250
        %280 = vmatprep.subr.mxu0 0.0
        %281 = vmatpush1.msra.mxu0 %v251
        %282 = vmatprep.subr.mxu0 0.0
        %283 = vmatpush1.msra.mxu0 %v252
        %284 = vmatprep.subr.mxu0 0.0
        %285 = vmatpush1.msra.mxu0 %v253
        %286 = vmatprep.subr.mxu0 0.0
        %287 = vmatpush1.msra.mxu0 0.0
        %288 = vmatprep.subr.mxu0 0.0
        %289 = vmatpush1.msra.mxu0 0.0
        %290 = vmatprep.subr.mxu0 0.0
        %291 = vmatpush1.msra.mxu0 0.0
        %292 = vmatprep.subr.mxu0 0.0
        %293 = vmatpush1.msra.mxu0 0.0
        %294 = vmatprep.subr.mxu0 0.0
        %295 = vmatpush1.msra.mxu0 0.0
        %296 = vmatprep.subr.mxu0 0.0
        %297 = vmatpush1.msra.mxu0 0.0
        %298 = vmatprep.subr.mxu0 0.0
        %299 = vmatpush1.msra.mxu0 0.0
        %300 = vmatprep.subr.mxu0 0.0
        %301 = vmatpush1.msra.mxu0 0.0
        %302 = vmatprep.subr.mxu0 0.0
        %303 = vmatpush1.msra.mxu0 0.0
        %304 = vmatprep.subr.mxu0 0.0
        %305 = vmatpush1.msra.mxu0 0.0
        %306 = vmatprep.subr.mxu0 0.0
        %307 = vmatpush1.msra.mxu0 0.0
        %308 = vmatprep.subr.mxu0 0.0
        %309 = vmatpush1.msra.mxu0 0.0
        %310 = vmatprep.subr.mxu0 0.0
        %311 = vmatpush1.msra.mxu0 0.0
        %312 = vmatprep.subr.mxu0 0.0
        %313 = vmatpush1.msra.mxu0 0.0
        %314 = vmatprep.subr.mxu0 0.0
        %315 = vmatpush1.msra.mxu0 0.0
        %316 = vmatprep.subr.mxu0 0.0
        %317 = vmatpush1.msra.mxu0 0.0
        %318 = vmatprep.mubr.f32.mxu0 0.0
        %319 = vmatmul.mubr.f32.gmra.mrb[0].mxu0 %v237
        %v320 = vpop.f32.mrb[0].mxu0
        %v321 = vadd.f32 0.0, %v320
        %v322 = vpop.f32.mrb[0].mxu0
        %323 = vdwg.mxu0
        %v324 = vadd.f32 %v236, %v321
        %vm325 = vcmask 254976
        %326 = vst.msk [vmem:[#allocation2] sm:$0x3] %vm325, %v324
        %p327 = scmp.eq.s32.totalorder %s17, 1
        // Predicated region
        $region45: #{gcne_forward.7} parent=39 // pred_check
          %p328 = pneg %p327
        $region46: #{gcne_forward.7} parent=39 // pred_check_branch
          %330 = sbr.rel (%p328) target = $region48
        $region47: #{gcne_forward.7} parent=39 // pred_region
          %v331 = vld [vmem:[#allocation2] sm:$0x3]
          %v332 = vld [vmem:[%s2] sm:$0x1]
          %v334 = vlaneseq
          %v335 = vshrl.u32 %v334, 7
          %v336 = vsub.s32 0, %v335
          %v337 = vrot.slane %v332, %v336
          %v339 = vadd.f32 %v331, %v337
          %v340 = vmax.f32 %v339, 0.0
          %v341 = vld [vmem:[%s3] sm:$0xff]
          %v342 = vld [vmem:[%s3 + $0x8] sm:$0xff]
          %v343 = vld [vmem:[%s3 + $0x10] sm:$0xff]
          %v344 = vld [vmem:[%s3 + $0x18] sm:$0xff]
          %v345 = vld [vmem:[%s4] sm:$0x1]
          %v347 = vlaneseq
          %v348 = vshrl.u32 %v347, 7
          %v349 = vsub.s32 0, %v348
          %v350 = vrot.slane %v345, %v349
          %vm352 = vcmask 261120
          %v354 = vsel %vm352, %v340, 0
          %356 = vmatprep.subr.mxu0 0.0
          %357 = vmatpush1.msra.mxu0 %v341
          %358 = vmatprep.subr.mxu0 0.0
          %359 = vmatpush1.msra.mxu0 %v342
          %360 = vmatprep.subr.mxu0 0.0
          %361 = vmatpush1.msra.mxu0 %v343
          %362 = vmatprep.subr.mxu0 0.0
          %363 = vmatpush1.msra.mxu0 %v344
          %364 = vmatprep.subr.mxu0 0.0
          %365 = vmatpush1.msra.mxu0 0.0
          %366 = vmatprep.subr.mxu0 0.0
          %367 = vmatpush1.msra.mxu0 0.0
          %368 = vmatprep.subr.mxu0 0.0
          %369 = vmatpush1.msra.mxu0 0.0
          %370 = vmatprep.subr.mxu0 0.0
          %371 = vmatpush1.msra.mxu0 0.0
          %372 = vmatprep.subr.mxu0 0.0
          %373 = vmatpush1.msra.mxu0 0.0
          %374 = vmatprep.subr.mxu0 0.0
          %375 = vmatpush1.msra.mxu0 0.0
          %376 = vmatprep.subr.mxu0 0.0
          %377 = vmatpush1.msra.mxu0 0.0
          %378 = vmatprep.subr.mxu0 0.0
          %379 = vmatpush1.msra.mxu0 0.0
          %380 = vmatprep.subr.mxu0 0.0
          %381 = vmatpush1.msra.mxu0 0.0
          %382 = vmatprep.subr.mxu0 0.0
          %383 = vmatpush1.msra.mxu0 0.0
          %384 = vmatprep.subr.mxu0 0.0
          %385 = vmatpush1.msra.mxu0 0.0
          %386 = vmatprep.subr.mxu0 0.0
          %387 = vmatpush1.msra.mxu0 0.0
          %388 = vmatprep.subr.mxu0 0.0
          %389 = vmatpush1.msra.mxu0 0.0
          %390 = vmatprep.subr.mxu0 0.0
          %391 = vmatpush1.msra.mxu0 0.0
          %392 = vmatprep.subr.mxu0 0.0
          %393 = vmatpush1.msra.mxu0 0.0
          %394 = vmatprep.subr.mxu0 0.0
          %395 = vmatpush1.msra.mxu0 0.0
          %396 = vmatprep.subr.mxu0 0.0
          %397 = vmatpush1.msra.mxu0 0.0
          %398 = vmatprep.subr.mxu0 0.0
          %399 = vmatpush1.msra.mxu0 0.0
          %400 = vmatprep.subr.mxu0 0.0
          %401 = vmatpush1.msra.mxu0 0.0
          %402 = vmatprep.subr.mxu0 0.0
          %403 = vmatpush1.msra.mxu0 0.0
          %404 = vmatprep.subr.mxu0 0.0
          %405 = vmatpush1.msra.mxu0 0.0
          %406 = vmatprep.subr.mxu0 0.0
          %407 = vmatpush1.msra.mxu0 0.0
          %408 = vmatprep.subr.mxu0 0.0
          %409 = vmatpush1.msra.mxu0 0.0
          %410 = vmatprep.subr.mxu0 0.0
          %411 = vmatpush1.msra.mxu0 0.0
          %412 = vmatprep.subr.mxu0 0.0
          %413 = vmatpush1.msra.mxu0 0.0
          %414 = vmatprep.subr.mxu0 0.0
          %415 = vmatpush1.msra.mxu0 0.0
          %416 = vmatprep.subr.mxu0 0.0
          %417 = vmatpush1.msra.mxu0 0.0
          %418 = vmatprep.subr.mxu0 0.0
          %419 = vmatpush1.msra.mxu0 0.0
          %420 = vmatprep.mubr.f32.mxu0 0.0
          %421 = vmatmul.mubr.f32.gmra.mrb[0].mxu0 %v354
          %v422 = vpop.f32.mrb[0].mxu0
          %v423 = vadd.f32 %v350, %v422
          %v424 = vpop.f32.mrb[0].mxu0
          %425 = vdwg.mxu0
          %vm426 = vcmask 17408
          %v427 = vsel %vm426, %v423, -inf
          %428 = vmax.xlane.f32.xlu0 %v427
          %v429 = vpop.xlane.xlu0 %428
          %v430 = vsub.f32 %v423, %v429
          %v431 = vmul.f32 %v430, 1.442695
          %v432 = vpow.pop %v431
          %v433 = vsel %vm426, %v432, 0.0
          %434 = vadd.xlane.f32.xlu0 %v433
          %v435 = vpop.xlane.xlu0 %434
          %v436 = vlog2.pop %v435
          %v437 = vmul.f32 %v436, 0.6931472
          %v438 = vsub.f32 %v430, %v437
          %439 = vst.msk [vmem:[#allocation3] sm:$0x3] %vm426, %v438
        $region48: #{gcne_forward.7} parent=39 // pred_fallthru
          _
        // Predicated region
        $region49: #{gcne_forward.7} parent=39 // pred_check
          %p440 = pneg %p145
        $region50: #{gcne_forward.7} parent=39 // pred_check_branch
          %442 = sbr.rel (%p440) target = $region52
        $region51: #{gcne_forward.7} parent=39 // pred_region
          %s444 = ssub.s32 32, 32
          %445 = vsyncadd [#allocation4], %s444
          %s447 = sshll.u32 [#allocation3], 4
          %s448 = int_to_ptr.vmem [resolvable:$true] %s447
          %450 = dma.vmem_to_hbm [thread:$0]  %s448, 32, %s5, [#allocation4]
        $region52: #{gcne_forward.7} parent=39 // pred_fallthru
          _
        // Predicated region
        $region53: #{gcne_forward.7} parent=39 // pred_check
          %p451 = pneg %p145
        $region54: #{gcne_forward.7} parent=39 // pred_check_branch
          %453 = sbr.rel (%p451) target = $region56
        $region55: #{gcne_forward.7} parent=39 // pred_region
          %454 = dma.done [#allocation4], 32
        $region56: #{gcne_forward.7} parent=39 // pred_fallthru
          _
      $region40: #{gcne_forward.7} parent=5 // pred_fallthru
        _
      %p455 = scmp.le.s32.totalorder 2, %s12
      // Predicated region
      $region57: #{gcne_forward.7} parent=5 // pred_check
        %p456 = pneg %p455
      $region58: #{gcne_forward.7} parent=5 // pred_check_branch
        %458 = sbr.rel (%p456) target = $region60
      $region59: #{gcne_forward.7} parent=5 // pred_region
        %s459 = ssub.s32 %s12, 2
      $region60: #{gcne_forward.7} parent=5 // pred_fallthru
        _
    $region6: #{gcne_forward.7} parent=1 // loop_footer
      %s16 = sadd.s32 1, %s12
    $region7: #{gcne_forward.7} parent=1 // loop_footer_branch
      %11 = sbr.rel target = $region3
    $region8: #{gcne_forward.7} parent=1 // loop_exit
      _
    %460 = vsyncpa [#allocation4], 1
    %s461 = scalar_lea.sflag [#allocation4], 1
    %462 = vsyncpa %s461, 1

</llo_original>
